<compile_context>
chip_gen: v7x
topology: tpu7x:2x2x1
jax: 0.10.0
libtpu: 0.0.40
codegen_flags: <defaults>
</compile_context>

<pallas_src>
import functools
import math

import jax
import jax.numpy as jnp
from jax import lax
from jax.experimental import pallas as pl
from jax.experimental.pallas import tpu as pltpu

_SQRT2 = math.sqrt(2.0)
_CLS_PAD = 128  # lane-dense padding of the 2-way classifier output


# ----------------------------------------------------------------------------
# Generation-aware tuning knobs
# ----------------------------------------------------------------------------
@functools.lru_cache(maxsize=None)
def _vmem_budget_bytes():
    """~60% of the physical per-core VMEM (v5e/v6e: 128 MiB -> ~76 MiB, v7x: 64 MiB -> ~38 MiB)."""
    try:
        cap = int(pltpu.get_tpu_info().vmem_capacity_bytes)
    except Exception:  # pragma: no cover - conservative fallback (v7x-sized)
        cap = 64 * 1024 * 1024
    return max(16 * 1024 * 1024, int(cap * 0.6))


@functools.lru_cache(maxsize=None)
def _max_row_tile():
    # 512-row tiles reach ~85% of HBM roofline on 128 MiB-VMEM parts (v5e/v6e);
    # stay at 256 rows on v7x (64 MiB VMEM) so resident weights + tiles fit comfortably.
    return 512 if _vmem_budget_bytes() >= 64 * 1024 * 1024 else 256


def _row_tile(n):
    t = _max_row_tile()
    return n if n <= t else t


def _compiler_params():
    return pltpu.CompilerParams(dimension_semantics=("parallel",),
                                vmem_limit_bytes=_vmem_budget_bytes())


# ----------------------------------------------------------------------------
# Small math helpers (all f32 inside kernels)
# ----------------------------------------------------------------------------
def _gelu_exact(x):
    # PyTorch nn.GELU default (erf-based, exact).
    return 0.5 * x * (1.0 + lax.erf(x / _SQRT2))


def _ln_f32(y, g, b, eps):
    mu = jnp.mean(y, axis=-1, keepdims=True)
    yc = y - mu
    var = jnp.mean(yc * yc, axis=-1, keepdims=True)
    return yc * lax.rsqrt(var + eps) * g + b


def _matmul_cost(n, din, dout, transcendentals=0):
    return pl.CostEstimate(
        flops=2 * n * din * dout,
        transcendentals=transcendentals,
        bytes_accessed=4 * n * din + 2 * din * dout + 4 * dout + 4 * n * dout)


# ----------------------------------------------------------------------------
# Pallas kernels
# ----------------------------------------------------------------------------
def _linear_kernel(x_ref, w_ref, b_ref, o_ref):
    """y = x @ W + b. Row-tiled; bf16 MXU inputs, f32 accumulate, out dtype per out_shape."""
    y = jnp.dot(x_ref[...].astype(jnp.bfloat16), w_ref[...],
                preferred_element_type=jnp.float32)
    o_ref[...] = (y + b_ref[...]).astype(o_ref.dtype)


def linear(x, w, b, out_dtype=jnp.bfloat16):
    """x: [N, Din], w: [Din, Dout] bf16, b: [1, Dout] f32 -> [N, Dout] (bf16 by default)."""
    n, din = x.shape
    dout = w.shape[1]
    tm = _row_tile(n)
    # TODO(synk): on v7x the constant-index weight specs (lambda i: (0, 0)) would benefit from
    #             pipeline_mode=pl.Buffered(1) (no double-buffering of resident weights); left
    #             at the default buffering here for maximum portability.
    return pl.pallas_call(
        _linear_kernel,
        grid=(pl.cdiv(n, tm),),
        in_specs=[pl.BlockSpec((tm, din), lambda i: (i, 0)),
                  pl.BlockSpec((din, dout), lambda i: (0, 0)),
                  pl.BlockSpec((1, dout), lambda i: (0, 0))],
        out_specs=pl.BlockSpec((tm, dout), lambda i: (i, 0)),
        out_shape=jax.ShapeDtypeStruct((n, dout), out_dtype),
        compiler_params=_compiler_params(),
        cost_estimate=_matmul_cost(n, din, dout),
    )(x, w, b)


def _linear_res_ln_kernel(x_ref, w_ref, b_ref, r_ref, g_ref, be_ref, o_ref, *, eps):
    """out = LayerNorm((x @ W + b) + residual) * gamma + beta  (fused matmul epilogue)."""
    y = jnp.dot(x_ref[...].astype(jnp.bfloat16), w_ref[...],
                preferred_element_type=jnp.float32)
    y = y + b_ref[...] + r_ref[...]
    o_ref[...] = _ln_f32(y, g_ref[...], be_ref[...], eps).astype(o_ref.dtype)


def linear_residual_layernorm(x, w, b, residual, gamma, beta, eps):
    """x: [N, Din] (bf16 ok), w: [Din, Dout] bf16, residual: [N, Dout] f32 -> [N, Dout] f32."""
    n, din = x.shape
    dout = w.shape[1]
    tm = _row_tile(n)
    return pl.pallas_call(
        functools.partial(_linear_res_ln_kernel, eps=eps),
        grid=(pl.cdiv(n, tm),),
        in_specs=[pl.BlockSpec((tm, din), lambda i: (i, 0)),
                  pl.BlockSpec((din, dout), lambda i: (0, 0)),
                  pl.BlockSpec((1, dout), lambda i: (0, 0)),
                  pl.BlockSpec((tm, dout), lambda i: (i, 0)),
                  pl.BlockSpec((1, dout), lambda i: (0, 0)),
                  pl.BlockSpec((1, dout), lambda i: (0, 0))],
        out_specs=pl.BlockSpec((tm, dout), lambda i: (i, 0)),
        out_shape=jax.ShapeDtypeStruct((n, dout), jnp.float32),
        compiler_params=_compiler_params(),
        cost_estimate=_matmul_cost(n, din, dout),
    )(x, w, b, residual, gamma, beta)


def _ffn_res_ln_kernel(x_ref, w1_ref, b1_ref, w2_ref, b2_ref, g_ref, be_ref, o_ref, *, eps):
    """Fused FFN block: LayerNorm(GELU(x@W1+b1)@W2 + b2 + x). [tm, I] intermediate stays in VMEM."""
    x = x_ref[...]                                                   # [tm, H] f32 residual
    h = jnp.dot(x.astype(jnp.bfloat16), w1_ref[...],
                preferred_element_type=jnp.float32) + b1_ref[...]
    h = _gelu_exact(h)
    y = jnp.dot(h.astype(jnp.bfloat16), w2_ref[...],
                preferred_element_type=jnp.float32) + b2_ref[...]
    o_ref[...] = _ln_f32(y + x, g_ref[...], be_ref[...], eps).astype(o_ref.dtype)


def ffn_residual_layernorm(x, w1, b1, w2, b2, gamma, beta, eps):
    """x: [N, H] f32 -> [N, H] f32; intermediate [N, I] never touches HBM."""
    n, h = x.shape
    i = w1.shape[1]
    tm = _row_tile(n)
    cost = pl.CostEstimate(flops=4 * n * h * i, transcendentals=n * i,
                           bytes_accessed=8 * n * h + 4 * h * i + 4 * (i + 3 * h))
    return pl.pallas_call(
        functools.partial(_ffn_res_ln_kernel, eps=eps),
        grid=(pl.cdiv(n, tm),),
        in_specs=[pl.BlockSpec((tm, h), lambda k: (k, 0)),
                  pl.BlockSpec((h, i), lambda k: (0, 0)),
                  pl.BlockSpec((1, i), lambda k: (0, 0)),
                  pl.BlockSpec((i, h), lambda k: (0, 0)),
                  pl.BlockSpec((1, h), lambda k: (0, 0)),
                  pl.BlockSpec((1, h), lambda k: (0, 0)),
                  pl.BlockSpec((1, h), lambda k: (0, 0))],
        out_specs=pl.BlockSpec((tm, h), lambda k: (k, 0)),
        out_shape=jax.ShapeDtypeStruct((n, h), jnp.float32),
        compiler_params=_compiler_params(),
        cost_estimate=cost,
    )(x, w1, b1, w2, b2, gamma, beta)


def _ln_kernel(x_ref, g_ref, b_ref, o_ref, *, eps):
    """Plain LayerNorm over the hidden axis (embedding LN)."""
    o_ref[...] = _ln_f32(x_ref[...], g_ref[...], b_ref[...], eps).astype(o_ref.dtype)


def layernorm(x, gamma, beta, eps):
    n, h = x.shape
    tm = _row_tile(n)
    return pl.pallas_call(
        functools.partial(_ln_kernel, eps=eps),
        grid=(pl.cdiv(n, tm),),
        in_specs=[pl.BlockSpec((tm, h), lambda i: (i, 0)),
                  pl.BlockSpec((1, h), lambda i: (0, 0)),
                  pl.BlockSpec((1, h), lambda i: (0, 0))],
        out_specs=pl.BlockSpec((tm, h), lambda i: (i, 0)),
        out_shape=jax.ShapeDtypeStruct((n, h), jnp.float32),
        compiler_params=_compiler_params(),
    )(x, gamma, beta)


def _attn_kernel(qkv_ref, m_ref, o_ref, *, num_heads, head_dim):
    """Per-batch attention over all heads; batched-einsum heads, single lane-dense [S,H] store."""
    seq = qkv_ref.shape[1]
    hidden = num_heads * head_dim
    x = qkv_ref[0]                                   # [S, 3, nH, dh] bf16 (tile-aligned DMA block)
    q = jnp.transpose(x[:, 0], (1, 0, 2))            # [nH, S, dh]  (major-dim transposes only)
    k = jnp.transpose(x[:, 1], (1, 0, 2))
    v = jnp.transpose(x[:, 2], (1, 0, 2))
    mask = m_ref[0]                                  # [1, S] additive f32 (0 or finfo(f32).min)
    # NOTE: the 1/sqrt(head_dim) scale is folded into the Q projection weights at init.
    s = jnp.einsum('hqd,hkd->hqk', q, k, preferred_element_type=jnp.float32)
    s = s + mask[None]                               # broadcast over heads and query rows
    s = s - jnp.max(s, axis=-1, keepdims=True)
    p = jnp.exp(s)
    p = p * pl.reciprocal(jnp.sum(p, axis=-1, keepdims=True), approx=True)
    ctx = jnp.einsum('hqk,hkd->hqd', p.astype(jnp.bfloat16), v,
                     preferred_element_type=jnp.float32)             # [nH, S, dh]
    # merge heads in-VMEM and emit one lane-dense [S, H] store (no per-head masked stores)
    o_ref[0] = jnp.transpose(ctx, (1, 0, 2)).reshape(seq, hidden).astype(o_ref.dtype)
    # TODO(synk): for S >= ~1k this should become a KV-tiled online-softmax (flash) loop and,
    #             on v7x, grid over (B, num_heads) for more pipeline steps / both TensorCores.


def attention(qkv_heads, ext_mask, num_heads, head_dim):
    """qkv_heads: [B, S, 3, nH, dh] bf16 (free view of packed QKV); ext_mask: [B,1,S] f32."""
    B, S = qkv_heads.shape[0], qkv_heads.shape[1]
    H = num_heads * head_dim
    cost = pl.CostEstimate(
        flops=4 * B * num_heads * S * S * head_dim,
        transcendentals=B * num_heads * S * S,
        bytes_accessed=2 * B * S * 3 * H + 4 * B * S + 2 * B * S * H)
    return pl.pallas_call(
        functools.partial(_attn_kernel, num_heads=num_heads, head_dim=head_dim),
        grid=(B,),
        in_specs=[pl.BlockSpec((1, S, 3, num_heads, head_dim), lambda b: (b, 0, 0, 0, 0)),
                  pl.BlockSpec((1, 1, S), lambda b: (b, 0, 0))],
        out_specs=pl.BlockSpec((1, S, H), lambda b: (b, 0, 0)),
        out_shape=jax.ShapeDtypeStruct((B, S, H), jnp.bfloat16),
        compiler_params=_compiler_params(),
        cost_estimate=cost,
    )(qkv_heads, ext_mask)


def _head_kernel(x_ref, w1_ref, b1_ref, g_ref, be_ref, w2_ref, b2_ref, o_ref, *, eps):
    """Fused segmentation head: GELU(x@W1+b1) -> LayerNorm -> @W2_pad + b2_pad (lane-dense)."""
    h = jnp.dot(x_ref[...].astype(jnp.bfloat16), w1_ref[...],
                preferred_element_type=jnp.float32) + b1_ref[...]
    h = _gelu_exact(h)
    h = _ln_f32(h, g_ref[...], be_ref[...], eps)
    y = jnp.dot(h.astype(jnp.bfloat16), w2_ref[...],
                preferred_element_type=jnp.float32) + b2_ref[...]
    o_ref[...] = y.astype(o_ref.dtype)


def classifier_head(x, w1, b1, gamma, beta, w2_pad, b2_pad, eps):
    """x: [N, H] f32 -> [N, _CLS_PAD] f32 (only the first 2 lanes are real logits)."""
    n, h = x.shape
    pad_out = w2_pad.shape[1]
    tm = _row_tile(n)
    return pl.pallas_call(
        functools.partial(_head_kernel, eps=eps),
        grid=(pl.cdiv(n, tm),),
        in_specs=[pl.BlockSpec((tm, h), lambda i: (i, 0)),
                  pl.BlockSpec((h, h), lambda i: (0, 0)),
                  pl.BlockSpec((1, h), lambda i: (0, 0)),
                  pl.BlockSpec((1, h), lambda i: (0, 0)),
                  pl.BlockSpec((1, h), lambda i: (0, 0)),
                  pl.BlockSpec((h, pad_out), lambda i: (0, 0)),
                  pl.BlockSpec((1, pad_out), lambda i: (0, 0))],
        out_specs=pl.BlockSpec((tm, pad_out), lambda i: (i, 0)),
        out_shape=jax.ShapeDtypeStruct((n, pad_out), jnp.float32),
        compiler_params=_compiler_params(),
        cost_estimate=_matmul_cost(n, h, h + pad_out, transcendentals=n * h),
    )(x, w1, b1, gamma, beta, w2_pad, b2_pad)


# ----------------------------------------------------------------------------
# Parameter initialization (deterministic, synthetic)
# ----------------------------------------------------------------------------
def init_params(key, cfg):
    H = cfg["hidden_size"]
    I = cfg["intermediate_size"]
    dh = H // cfg["num_heads"]
    scale = 0.02

    def nrm(k, shape):
        return scale * jax.random.normal(k, shape, dtype=jnp.float32)

    keys = jax.random.split(key, 8 + 8 * cfg["num_layers"])
    it = iter(keys)

    params = {
        "word_emb": nrm(next(it), (cfg["vocab_size"], H)).at[cfg["pad_token_id"]].set(0.0),
        "pos_emb": nrm(next(it), (cfg["max_position_embeddings"], H)),
        "type_emb": nrm(next(it), (cfg["type_vocab_size"], H)),
        "da_emb": nrm(next(it), (cfg["num_da_labels"], H)),
        "role_emb": nrm(next(it), (cfg["num_role_labels"], H)),
        "emb_ln_g": jnp.ones((1, H), jnp.float32),
        "emb_ln_b": jnp.zeros((1, H), jnp.float32),
        # segmentation classifier: Linear(H,H) -> GELU -> LayerNorm -> Linear(H,2)
        "cls_w1": nrm(next(it), (H, H)).astype(jnp.bfloat16),
        "cls_b1": jnp.zeros((1, H), jnp.float32),
        "cls_ln_g": jnp.ones((1, H), jnp.float32),
        "cls_ln_b": jnp.zeros((1, H), jnp.float32),
    }
    w2 = nrm(next(it), (H, 2))
    # lane-dense classifier output: pad Dout 2 -> 128 with zeros, slice back in glue.
    params["cls_w2_pad"] = jnp.pad(w2, ((0, 0), (0, _CLS_PAD - 2))).astype(jnp.bfloat16)
    params["cls_b2_pad"] = jnp.zeros((1, _CLS_PAD), jnp.float32)

    attn_scale = 1.0 / math.sqrt(dh)
    layers = []
    for _ in range(cfg["num_layers"]):
        wq = nrm(next(it), (H, H)) * attn_scale       # fold 1/sqrt(dh) into the Q projection
        wk = nrm(next(it), (H, H))
        wv = nrm(next(it), (H, H))
        layer = {
            # fused Q|K|V projection
            "wqkv": jnp.concatenate([wq, wk, wv], axis=1).astype(jnp.bfloat16),
            "bqkv": jnp.zeros((1, 3 * H), jnp.float32),   # q-bias would also be scaled (zero here)
            "wo": nrm(next(it), (H, H)).astype(jnp.bfloat16),
            "bo": jnp.zeros((1, H), jnp.float32),
            "ln1_g": jnp.ones((1, H), jnp.float32), "ln1_b": jnp.zeros((1, H), jnp.float32),
            "w1": nrm(next(it), (H, I)).astype(jnp.bfloat16),
            "b1": jnp.zeros((1, I), jnp.float32),
            "w2": nrm(next(it), (I, H)).astype(jnp.bfloat16),
            "b2": jnp.zeros((1, H), jnp.float32),
            "ln2_g": jnp.ones((1, H), jnp.float32), "ln2_b": jnp.zeros((1, H), jnp.float32),
        }
        layers.append(layer)
    params["layers"] = layers
    return params


# ----------------------------------------------------------------------------
# Forward pass (JAX glue around the Pallas kernels)
# ----------------------------------------------------------------------------
def superseg_forward(params, input_ids, attention_mask, da_ids, role_ids, cfg):
    B, S = input_ids.shape
    H = cfg["hidden_size"]
    nH = cfg["num_heads"]
    dh = H // nH
    eps = cfg["layer_norm_eps"]
    pad = cfg["pad_token_id"]
    N = B * S

    # --- embeddings (gathers are XLA glue; LayerNorm is a row-tiled Pallas kernel) ---
    nonpad = (input_ids != pad).astype(jnp.int32)
    # create_position_ids_from_input_ids: cumsum(mask) * mask + padding_idx
    position_ids = jnp.cumsum(nonpad, axis=1) * nonpad + pad
    token_type_ids = jnp.zeros((B, S), dtype=jnp.int32)

    emb = (params["word_emb"][input_ids]
           + params["type_emb"][token_type_ids]
           + params["pos_emb"][position_ids]
           + params["da_emb"][da_ids]
           + params["role_emb"][role_ids]).astype(jnp.float32)

    x = layernorm(emb.reshape(N, H), params["emb_ln_g"], params["emb_ln_b"], eps)
    # TODO(synk): dropout layers are identity here (inference semantics).

    # --- extended attention mask (HF: (1 - mask) * finfo.min), kept f32, shape [B,1,S] ---
    ext_mask = ((1.0 - attention_mask.astype(jnp.float32))
                * jnp.finfo(jnp.float32).min)[:, None, :]

    # --- transformer encoder layers ---
    for layer in params["layers"]:
        qkv = linear(x, layer["wqkv"], layer["bqkv"])           # [N, 3H] bf16
        qkv_heads = qkv.reshape(B, S, 3, nH, dh)                # free view reshape (no transpose)
        ctx = attention(qkv_heads, ext_mask, nH, dh)            # [B, S, H] bf16
        # attn output projection fused with residual + LayerNorm
        x = linear_residual_layernorm(ctx.reshape(N, H), layer["wo"], layer["bo"],
                                      x, layer["ln1_g"], layer["ln1_b"], eps)
        # fully fused FFN (w1 -> GELU -> w2 -> residual -> LayerNorm); no [N, I] HBM round-trip
        x = ffn_residual_layernorm(x, layer["w1"], layer["b1"], layer["w2"], layer["b2"],
                                   layer["ln2_g"], layer["ln2_b"], eps)

    # --- segmentation classifier head (fully fused, lane-dense output) ---
    logits_pad = classifier_head(x, params["cls_w1"], params["cls_b1"],
                                 params["cls_ln_g"], params["cls_ln_b"],
                                 params["cls_w2_pad"], params["cls_b2_pad"], eps)
    return logits_pad[:, :2].reshape(B, S, 2)


# ----------------------------------------------------------------------------
# Main
# ----------------------------------------------------------------------------
if __name__ == "__main__":
    cfg = dict(
        vocab_size=100,
        hidden_size=32,
        num_layers=2,
        num_heads=2,
        intermediate_size=64,
        max_position_embeddings=64,
        type_vocab_size=2,
        pad_token_id=1,
        layer_norm_eps=1e-5,
        num_da_labels=10,   # len(DOC2DIAL_DA2LABEL) placeholder
        num_role_labels=2,  # len(ROLE2LABEL) placeholder
    )

    B, S = 2, 8
    key = jax.random.PRNGKey(0)
    k_par, k_ids, k_da, k_role = jax.random.split(key, 4)

    params = init_params(k_par, cfg)

    input_ids = jax.random.randint(k_ids, (B, S), 2, cfg["vocab_size"], dtype=jnp.int32)
    attention_mask = jnp.ones((B, S), jnp.int32).at[1, 6:].set(0)
    input_ids = jnp.where(attention_mask == 1, input_ids, cfg["pad_token_id"])
    da_ids = jax.random.randint(k_da, (B, S), 0, cfg["num_da_labels"], dtype=jnp.int32)
    role_ids = jax.random.randint(k_role, (B, S), 0, cfg["num_role_labels"], dtype=jnp.int32)

    fwd = jax.jit(functools.partial(superseg_forward, cfg=cfg))
    logits = fwd(params, input_ids, attention_mask, da_ids, role_ids)
    logits = jax.block_until_ready(logits)

    assert logits.shape == (B, S, 2) and logits.dtype == jnp.float32
    assert bool(jnp.all(jnp.isfinite(logits)))
    print("KERNEL_OK")
</pallas_src>

<mosaic_0001>
module attributes {stable_mosaic.version = 11 : i64} {
  func.func @_ln_kernel(%arg0: i32, %arg1: memref<16x32xf32, #tpu.memory_space<vmem>>, %arg2: memref<1x32xf32, #tpu.memory_space<vmem>>, %arg3: memref<1x32xf32, #tpu.memory_space<vmem>>, %arg4: memref<16x32xf32, #tpu.memory_space<vmem>>) attributes {dimension_semantics = [#tpu.dimension_semantics<parallel>], iteration_bounds = array<i64: 1>, scalar_prefetch = 0 : i64, scratch_operands = 0 : i64, tpu.core_type = #tpu.core_type<tc>, window_params = [{transform_indices = @transform_0, window_bounds = array<i64: 16, 32>}, {pipeline_mode = #tpu.pipeline_mode<synchronous>, transform_indices = @transform_1, window_bounds = array<i64: 1, 32>}, {pipeline_mode = #tpu.pipeline_mode<synchronous>, transform_indices = @transform_2, window_bounds = array<i64: 1, 32>}, {transform_indices = @transform_3, window_bounds = array<i64: 16, 32>}]} {
    %c0 = arith.constant 0 : index
    %c0_0 = arith.constant 0 : index
    %0 = vector.load %arg1[%c0, %c0_0] : memref<16x32xf32, #tpu.memory_space<vmem>>, vector<16x32xf32>
    %c0_1 = arith.constant 0 : index
    %c0_2 = arith.constant 0 : index
    %1 = vector.load %arg2[%c0_1, %c0_2] : memref<1x32xf32, #tpu.memory_space<vmem>>, vector<1x32xf32>
    %c0_3 = arith.constant 0 : index
    %c0_4 = arith.constant 0 : index
    %2 = vector.load %arg3[%c0_3, %c0_4] : memref<1x32xf32, #tpu.memory_space<vmem>>, vector<1x32xf32>
    %cst = arith.constant dense<0.000000e+00> : vector<16xf32>
    %3 = vector.multi_reduction <add>, %0, %cst [1] : vector<16x32xf32> to vector<16xf32>
    %4 = vector.shape_cast %3 : vector<16xf32> to vector<16x1xf32>
    %cst_5 = arith.constant 3.200000e+01 : f32
    %5 = vector.broadcast %cst_5 : f32 to vector<16x1xf32>
    %6 = arith.divf %4, %5 : vector<16x1xf32>
    %7 = vector.broadcast %6 : vector<16x1xf32> to vector<16x32xf32>
    %8 = arith.subf %0, %7 : vector<16x32xf32>
    %9 = arith.mulf %8, %8 : vector<16x32xf32>
    %cst_6 = arith.constant dense<0.000000e+00> : vector<16xf32>
    %10 = vector.multi_reduction <add>, %9, %cst_6 [1] : vector<16x32xf32> to vector<16xf32>
    %11 = vector.shape_cast %10 : vector<16xf32> to vector<16x1xf32>
    %cst_7 = arith.constant 3.200000e+01 : f32
    %12 = vector.broadcast %cst_7 : f32 to vector<16x1xf32>
    %13 = arith.divf %11, %12 : vector<16x1xf32>
    %cst_8 = arith.constant 9.99999974E-6 : f32
    %14 = vector.broadcast %cst_8 : f32 to vector<16x1xf32>
    %15 = arith.addf %13, %14 : vector<16x1xf32>
    %16 = math.rsqrt %15 : vector<16x1xf32>
    %17 = vector.broadcast %16 : vector<16x1xf32> to vector<16x32xf32>
    %18 = arith.mulf %8, %17 : vector<16x32xf32>
    %19 = vector.broadcast %1 : vector<1x32xf32> to vector<16x32xf32>
    %20 = arith.mulf %18, %19 : vector<16x32xf32>
    %21 = vector.broadcast %2 : vector<1x32xf32> to vector<16x32xf32>
    %22 = arith.addf %20, %21 : vector<16x32xf32>
    %c0_9 = arith.constant 0 : index
    %c0_10 = arith.constant 0 : index
    %23 = vector.load %arg4[%c0_9, %c0_10] : memref<16x32xf32, #tpu.memory_space<vmem>>, vector<16x32xf32>
    tpu.vector_store %arg4[%c0_9, %c0_10], %22 {strides = array<i32>} : memref<16x32xf32, #tpu.memory_space<vmem>>, vector<16x32xf32>,
    return
  }
  func.func @transform_0(%arg0: i32) -> (i32, i32) {
    %c0_i32 = arith.constant 0 : i32
    %c0_i32_0 = arith.constant 0 : i32
    return %arg0, %c0_i32 : i32, i32
  }
  func.func @transform_1(%arg0: i32) -> (i32, i32) {
    %c0_i32 = arith.constant 0 : i32
    %c0_i32_0 = arith.constant 0 : i32
    %c0_i32_1 = arith.constant 0 : i32
    return %c0_i32, %c0_i32_0 : i32, i32
  }
  func.func @transform_2(%arg0: i32) -> (i32, i32) {
    %c0_i32 = arith.constant 0 : i32
    %c0_i32_0 = arith.constant 0 : i32
    %c0_i32_1 = arith.constant 0 : i32
    return %c0_i32, %c0_i32_0 : i32, i32
  }
  func.func @transform_3(%arg0: i32) -> (i32, i32) {
    %c0_i32 = arith.constant 0 : i32
    %c0_i32_0 = arith.constant 0 : i32
    return %arg0, %c0_i32 : i32, i32
  }
}

module attributes {stable_mosaic.version = 11 : i64} {
  func.func @_linear_kernel(%arg0: i32, %arg1: memref<16x32xf32, #tpu.memory_space<vmem>>, %arg2: memref<32x96xbf16, #tpu.memory_space<vmem>>, %arg3: memref<1x96xf32, #tpu.memory_space<vmem>>, %arg4: memref<16x96xbf16, #tpu.memory_space<vmem>>) attributes {dimension_semantics = [#tpu.dimension_semantics<parallel>], iteration_bounds = array<i64: 1>, scalar_prefetch = 0 : i64, scratch_operands = 0 : i64, tpu.core_type = #tpu.core_type<tc>, window_params = [{transform_indices = @transform_0, window_bounds = array<i64: 16, 32>}, {pipeline_mode = #tpu.pipeline_mode<synchronous>, transform_indices = @transform_1, window_bounds = array<i64: 32, 96>}, {pipeline_mode = #tpu.pipeline_mode<synchronous>, transform_indices = @transform_2, window_bounds = array<i64: 1, 96>}, {transform_indices = @transform_3, window_bounds = array<i64: 16, 96>}]} {
    %c0 = arith.constant 0 : index
    %c0_0 = arith.constant 0 : index
    %0 = vector.load %arg1[%c0, %c0_0] : memref<16x32xf32, #tpu.memory_space<vmem>>, vector<16x32xf32>
    %1 = arith.truncf %0 : vector<16x32xf32> to vector<16x32xbf16>
    %c0_1 = arith.constant 0 : index
    %c0_2 = arith.constant 0 : index
    %2 = vector.load %arg2[%c0_1, %c0_2] : memref<32x96xbf16, #tpu.memory_space<vmem>>, vector<32x96xbf16>
    %cst = arith.constant dense<0.000000e+00> : vector<16x96xf32>
    %3 = tpu.matmul %1, %2, %cst {dimension_numbers = #tpu.dot_dimension_numbers<[1], [0], [0], [1], [0, 0, 1, 1], [], []>} : vector<16x32xbf16>, vector<32x96xbf16>, vector<16x96xf32> -> vector<16x96xf32>
    %c0_3 = arith.constant 0 : index
    %c0_4 = arith.constant 0 : index
    %4 = vector.load %arg3[%c0_3, %c0_4] : memref<1x96xf32, #tpu.memory_space<vmem>>, vector<1x96xf32>
    %5 = vector.broadcast %4 : vector<1x96xf32> to vector<16x96xf32>
    %6 = arith.addf %3, %5 : vector<16x96xf32>
    %7 = arith.truncf %6 : vector<16x96xf32> to vector<16x96xbf16>
    %c0_5 = arith.constant 0 : index
    %c0_6 = arith.constant 0 : index
    %8 = vector.load %arg4[%c0_5, %c0_6] : memref<16x96xbf16, #tpu.memory_space<vmem>>, vector<16x96xbf16>
    tpu.vector_store %arg4[%c0_5, %c0_6], %7 {strides = array<i32>} : memref<16x96xbf16, #tpu.memory_space<vmem>>, vector<16x96xbf16>,
    return
  }
  func.func @transform_0(%arg0: i32) -> (i32, i32) {
    %c0_i32 = arith.constant 0 : i32
    %c0_i32_0 = arith.constant 0 : i32
    return %arg0, %c0_i32 : i32, i32
  }
  func.func @transform_1(%arg0: i32) -> (i32, i32) {
    %c0_i32 = arith.constant 0 : i32
    %c0_i32_0 = arith.constant 0 : i32
    %c0_i32_1 = arith.constant 0 : i32
    return %c0_i32, %c0_i32_0 : i32, i32
  }
  func.func @transform_2(%arg0: i32) -> (i32, i32) {
    %c0_i32 = arith.constant 0 : i32
    %c0_i32_0 = arith.constant 0 : i32
    %c0_i32_1 = arith.constant 0 : i32
    return %c0_i32, %c0_i32_0 : i32, i32
  }
  func.func @transform_3(%arg0: i32) -> (i32, i32) {
    %c0_i32 = arith.constant 0 : i32
    %c0_i32_0 = arith.constant 0 : i32
    return %arg0, %c0_i32 : i32, i32
  }
}

module attributes {stable_mosaic.version = 11 : i64} {
  func.func @_attn_kernel(%arg0: i32, %arg1: memref<1x8x3x2x16xbf16, #tpu.memory_space<vmem>>, %arg2: memref<1x1x8xf32, #tpu.memory_space<vmem>>, %arg3: memref<1x8x32xbf16, #tpu.memory_space<vmem>>) attributes {dimension_semantics = [#tpu.dimension_semantics<parallel>], iteration_bounds = array<i64: 2>, scalar_prefetch = 0 : i64, scratch_operands = 0 : i64, tpu.core_type = #tpu.core_type<tc>, window_params = [{transform_indices = @transform_0, window_bounds = array<i64: 1, 8, 3, 2, 16>}, {transform_indices = @transform_1, window_bounds = array<i64: 1, 1, 8>}, {transform_indices = @transform_2, window_bounds = array<i64: 1, 8, 32>}]} {
    %c0 = arith.constant 0 : index
    %c0_0 = arith.constant 0 : index
    %c0_1 = arith.constant 0 : index
    %c0_2 = arith.constant 0 : index
    %c0_3 = arith.constant 0 : index
    %0 = vector.load %arg1[%c0, %c0_0, %c0_1, %c0_2, %c0_3] : memref<1x8x3x2x16xbf16, #tpu.memory_space<vmem>>, vector<1x8x3x2x16xbf16>
    %1 = vector.shape_cast %0 : vector<1x8x3x2x16xbf16> to vector<8x3x2x16xbf16>
    %2 = vector.extract_strided_slice %1 {offsets = [0, 0, 0, 0], sizes = [8, 1, 2, 16], strides = [1, 1, 1, 1]} : vector<8x3x2x16xbf16> to vector<8x1x2x16xbf16>
    %3 = vector.shape_cast %2 : vector<8x1x2x16xbf16> to vector<8x2x16xbf16>
    %4 = tpu.transpose %3, [1, 0, 2] : vector<8x2x16xbf16> -> vector<2x8x16xbf16>
    %5 = vector.extract_strided_slice %1 {offsets = [0, 1, 0, 0], sizes = [8, 1, 2, 16], strides = [1, 1, 1, 1]} : vector<8x3x2x16xbf16> to vector<8x1x2x16xbf16>
    %6 = vector.shape_cast %5 : vector<8x1x2x16xbf16> to vector<8x2x16xbf16>
    %7 = tpu.transpose %6, [1, 0, 2] : vector<8x2x16xbf16> -> vector<2x8x16xbf16>
    %8 = vector.extract_strided_slice %1 {offsets = [0, 2, 0, 0], sizes = [8, 1, 2, 16], strides = [1, 1, 1, 1]} : vector<8x3x2x16xbf16> to vector<8x1x2x16xbf16>
    %9 = vector.shape_cast %8 : vector<8x1x2x16xbf16> to vector<8x2x16xbf16>
    %10 = tpu.transpose %9, [1, 0, 2] : vector<8x2x16xbf16> -> vector<2x8x16xbf16>
    %c0_4 = arith.constant 0 : index
    %c0_5 = arith.constant 0 : index
    %c0_6 = arith.constant 0 : index
    %11 = vector.load %arg2[%c0_4, %c0_5, %c0_6] : memref<1x1x8xf32, #tpu.memory_space<vmem>>, vector<1x1x8xf32>
    %12 = vector.shape_cast %11 : vector<1x1x8xf32> to vector<1x8xf32>
    "tpu.trace_start"() <{level = 10 : i32, message = "hqd,hkd->hqk"}> : () -> ()
    %cst = arith.constant dense<0.000000e+00> : vector<2x8x8xf32>
    %13 = tpu.matmul %4, %7, %cst {dimension_numbers = #tpu.dot_dimension_numbers<[2], [2], [1], [1], [0, 0, 0, 1, 1, 1], [0], [0]>} : vector<2x8x16xbf16>, vector<2x8x16xbf16>, vector<2x8x8xf32> -> vector<2x8x8xf32>
    "tpu.trace_stop"() : () -> ()
    %14 = vector.shape_cast %12 : vector<1x8xf32> to vector<1x1x8xf32>
    %15 = vector.broadcast %14 : vector<1x1x8xf32> to vector<2x8x8xf32>
    %16 = arith.addf %13, %15 : vector<2x8x8xf32>
    %cst_7 = arith.constant dense<0xFF800000> : vector<2x8xf32>
    %17 = vector.multi_reduction <maximumf>, %16, %cst_7 [2] : vector<2x8x8xf32> to vector<2x8xf32>
    %18 = vector.shape_cast %17 : vector<2x8xf32> to vector<2x8x1xf32>
    %19 = vector.broadcast %18 : vector<2x8x1xf32> to vector<2x8x8xf32>
    %20 = arith.subf %16, %19 : vector<2x8x8xf32>
    %21 = math.exp %20 : vector<2x8x8xf32>
    %cst_8 = arith.constant dense<0.000000e+00> : vector<2x8xf32>
    %22 = vector.multi_reduction <add>, %21, %cst_8 [2] : vector<2x8x8xf32> to vector<2x8xf32>
    %23 = vector.shape_cast %22 : vector<2x8xf32> to vector<2x8x1xf32>
    %24 = tpu.reciprocal %23 {approx = true} : vector<2x8x1xf32> -> vector<2x8x1xf32>
    %25 = vector.broadcast %24 : vector<2x8x1xf32> to vector<2x8x8xf32>
    %26 = arith.mulf %21, %25 : vector<2x8x8xf32>
    %27 = arith.truncf %26 : vector<2x8x8xf32> to vector<2x8x8xbf16>
    "tpu.trace_start"() <{level = 10 : i32, message = "hqk,hkd->hqd"}> : () -> ()
    %cst_9 = arith.constant dense<0.000000e+00> : vector<2x8x16xf32>
    %28 = tpu.matmul %27, %10, %cst_9 {dimension_numbers = #tpu.dot_dimension_numbers<[2], [1], [1], [2], [0, 0, 0, 1, 1, 2], [0], [0]>} : vector<2x8x8xbf16>, vector<2x8x16xbf16>, vector<2x8x16xf32> -> vector<2x8x16xf32>
    "tpu.trace_stop"() : () -> ()
    %29 = tpu.transpose %28, [1, 0, 2] : vector<2x8x16xf32> -> vector<8x2x16xf32>
    %30 = vector.shape_cast %29 : vector<8x2x16xf32> to vector<8x32xf32>
    %31 = arith.truncf %30 : vector<8x32xf32> to vector<8x32xbf16>
    %c0_10 = arith.constant 0 : index
    %c0_11 = arith.constant 0 : index
    %c0_12 = arith.constant 0 : index
    %32 = vector.load %arg3[%c0_10, %c0_11, %c0_12] : memref<1x8x32xbf16, #tpu.memory_space<vmem>>, vector<1x8x32xbf16>
    %33 = vector.shape_cast %32 : vector<1x8x32xbf16> to vector<8x32xbf16>
    %34 = vector.shape_cast %31 : vector<8x32xbf16> to vector<1x8x32xbf16>
    tpu.vector_store %arg3[%c0_10, %c0_11, %c0_12], %34 {strides = array<i32>} : memref<1x8x32xbf16, #tpu.memory_space<vmem>>, vector<1x8x32xbf16>,
    return
  }
  func.func @transform_0(%arg0: i32) -> (i32, i32, i32, i32, i32) {
    %c0_i32 = arith.constant 0 : i32
    %c0_i32_0 = arith.constant 0 : i32
    %c0_i32_1 = arith.constant 0 : i32
    %c0_i32_2 = arith.constant 0 : i32
    %c0_i32_3 = arith.constant 0 : i32
    return %arg0, %c0_i32, %c0_i32_0, %c0_i32_1, %c0_i32_2 : i32, i32, i32, i32, i32
  }
  func.func @transform_1(%arg0: i32) -> (i32, i32, i32) {
    %c0_i32 = arith.constant 0 : i32
    %c0_i32_0 = arith.constant 0 : i32
    %c0_i32_1 = arith.constant 0 : i32
    return %arg0, %c0_i32, %c0_i32_0 : i32, i32, i32
  }
  func.func @transform_2(%arg0: i32) -> (i32, i32, i32) {
    %c0_i32 = arith.constant 0 : i32
    %c0_i32_0 = arith.constant 0 : i32
    %c0_i32_1 = arith.constant 0 : i32
    return %arg0, %c0_i32, %c0_i32_0 : i32, i32, i32
  }
}

module attributes {stable_mosaic.version = 11 : i64} {
  func.func @_linear_res_ln_kernel(%arg0: i32, %arg1: memref<16x32xbf16, #tpu.memory_space<vmem>>, %arg2: memref<32x32xbf16, #tpu.memory_space<vmem>>, %arg3: memref<1x32xf32, #tpu.memory_space<vmem>>, %arg4: memref<16x32xf32, #tpu.memory_space<vmem>>, %arg5: memref<1x32xf32, #tpu.memory_space<vmem>>, %arg6: memref<1x32xf32, #tpu.memory_space<vmem>>, %arg7: memref<16x32xf32, #tpu.memory_space<vmem>>) attributes {dimension_semantics = [#tpu.dimension_semantics<parallel>], iteration_bounds = array<i64: 1>, scalar_prefetch = 0 : i64, scratch_operands = 0 : i64, tpu.core_type = #tpu.core_type<tc>, window_params = [{transform_indices = @transform_0, window_bounds = array<i64: 16, 32>}, {pipeline_mode = #tpu.pipeline_mode<synchronous>, transform_indices = @transform_1, window_bounds = array<i64: 32, 32>}, {pipeline_mode = #tpu.pipeline_mode<synchronous>, transform_indices = @transform_2, window_bounds = array<i64: 1, 32>}, {transform_indices = @transform_3, window_bounds = array<i64: 16, 32>}, {pipeline_mode = #tpu.pipeline_mode<synchronous>, transform_indices = @transform_4, window_bounds = array<i64: 1, 32>}, {pipeline_mode = #tpu.pipeline_mode<synchronous>, transform_indices = @transform_5, window_bounds = array<i64: 1, 32>}, {transform_indices = @transform_6, window_bounds = array<i64: 16, 32>}]} {
    %c0 = arith.constant 0 : index
    %c0_0 = arith.constant 0 : index
    %0 = vector.load %arg1[%c0, %c0_0] : memref<16x32xbf16, #tpu.memory_space<vmem>>, vector<16x32xbf16>
    %c0_1 = arith.constant 0 : index
    %c0_2 = arith.constant 0 : index
    %1 = vector.load %arg2[%c0_1, %c0_2] : memref<32x32xbf16, #tpu.memory_space<vmem>>, vector<32x32xbf16>
    %cst = arith.constant dense<0.000000e+00> : vector<16x32xf32>
    %2 = tpu.matmul %0, %1, %cst {dimension_numbers = #tpu.dot_dimension_numbers<[1], [0], [0], [1], [0, 0, 1, 1], [], []>} : vector<16x32xbf16>, vector<32x32xbf16>, vector<16x32xf32> -> vector<16x32xf32>
    %c0_3 = arith.constant 0 : index
    %c0_4 = arith.constant 0 : index
    %3 = vector.load %arg3[%c0_3, %c0_4] : memref<1x32xf32, #tpu.memory_space<vmem>>, vector<1x32xf32>
    %4 = vector.broadcast %3 : vector<1x32xf32> to vector<16x32xf32>
    %5 = arith.addf %2, %4 : vector<16x32xf32>
    %c0_5 = arith.constant 0 : index
    %c0_6 = arith.constant 0 : index
    %6 = vector.load %arg4[%c0_5, %c0_6] : memref<16x32xf32, #tpu.memory_space<vmem>>, vector<16x32xf32>
    %7 = arith.addf %5, %6 : vector<16x32xf32>
    %c0_7 = arith.constant 0 : index
    %c0_8 = arith.constant 0 : index
    %8 = vector.load %arg5[%c0_7, %c0_8] : memref<1x32xf32, #tpu.memory_space<vmem>>, vector<1x32xf32>
    %c0_9 = arith.constant 0 : index
    %c0_10 = arith.constant 0 : index
    %9 = vector.load %arg6[%c0_9, %c0_10] : memref<1x32xf32, #tpu.memory_space<vmem>>, vector<1x32xf32>
    %cst_11 = arith.constant dense<0.000000e+00> : vector<16xf32>
    %10 = vector.multi_reduction <add>, %7, %cst_11 [1] : vector<16x32xf32> to vector<16xf32>
    %11 = vector.shape_cast %10 : vector<16xf32> to vector<16x1xf32>
    %cst_12 = arith.constant 3.200000e+01 : f32
    %12 = vector.broadcast %cst_12 : f32 to vector<16x1xf32>
    %13 = arith.divf %11, %12 : vector<16x1xf32>
    %14 = vector.broadcast %13 : vector<16x1xf32> to vector<16x32xf32>
    %15 = arith.subf %7, %14 : vector<16x32xf32>
    %16 = arith.mulf %15, %15 : vector<16x32xf32>
    %cst_13 = arith.constant dense<0.000000e+00> : vector<16xf32>
    %17 = vector.multi_reduction <add>, %16, %cst_13 [1] : vector<16x32xf32> to vector<16xf32>
    %18 = vector.shape_cast %17 : vector<16xf32> to vector<16x1xf32>
    %cst_14 = arith.constant 3.200000e+01 : f32
    %19 = vector.broadcast %cst_14 : f32 to vector<16x1xf32>
    %20 = arith.divf %18, %19 : vector<16x1xf32>
    %cst_15 = arith.constant 9.99999974E-6 : f32
    %21 = vector.broadcast %cst_15 : f32 to vector<16x1xf32>
    %22 = arith.addf %20, %21 : vector<16x1xf32>
    %23 = math.rsqrt %22 : vector<16x1xf32>
    %24 = vector.broadcast %23 : vector<16x1xf32> to vector<16x32xf32>
    %25 = arith.mulf %15, %24 : vector<16x32xf32>
    %26 = vector.broadcast %8 : vector<1x32xf32> to vector<16x32xf32>
    %27 = arith.mulf %25, %26 : vector<16x32xf32>
    %28 = vector.broadcast %9 : vector<1x32xf32> to vector<16x32xf32>
    %29 = arith.addf %27, %28 : vector<16x32xf32>
    %c0_16 = arith.constant 0 : index
    %c0_17 = arith.constant 0 : index
    %30 = vector.load %arg7[%c0_16, %c0_17] : memref<16x32xf32, #tpu.memory_space<vmem>>, vector<16x32xf32>
    tpu.vector_store %arg7[%c0_16, %c0_17], %29 {strides = array<i32>} : memref<16x32xf32, #tpu.memory_space<vmem>>, vector<16x32xf32>,
    return
  }
  func.func @transform_0(%arg0: i32) -> (i32, i32) {
    %c0_i32 = arith.constant 0 : i32
    %c0_i32_0 = arith.constant 0 : i32
    return %arg0, %c0_i32 : i32, i32
  }
  func.func @transform_1(%arg0: i32) -> (i32, i32) {
    %c0_i32 = arith.constant 0 : i32
    %c0_i32_0 = arith.constant 0 : i32
    %c0_i32_1 = arith.constant 0 : i32
    return %c0_i32, %c0_i32_0 : i32, i32
  }
  func.func @transform_2(%arg0: i32) -> (i32, i32) {
    %c0_i32 = arith.constant 0 : i32
    %c0_i32_0 = arith.constant 0 : i32
    %c0_i32_1 = arith.constant 0 : i32
    return %c0_i32, %c0_i32_0 : i32, i32
  }
  func.func @transform_3(%arg0: i32) -> (i32, i32) {
    %c0_i32 = arith.constant 0 : i32
    %c0_i32_0 = arith.constant 0 : i32
    return %arg0, %c0_i32 : i32, i32
  }
  func.func @transform_4(%arg0: i32) -> (i32, i32) {
    %c0_i32 = arith.constant 0 : i32
    %c0_i32_0 = arith.constant 0 : i32
    %c0_i32_1 = arith.constant 0 : i32
    return %c0_i32, %c0_i32_0 : i32, i32
  }
  func.func @transform_5(%arg0: i32) -> (i32, i32) {
    %c0_i32 = arith.constant 0 : i32
    %c0_i32_0 = arith.constant 0 : i32
    %c0_i32_1 = arith.constant 0 : i32
    return %c0_i32, %c0_i32_0 : i32, i32
  }
  func.func @transform_6(%arg0: i32) -> (i32, i32) {
    %c0_i32 = arith.constant 0 : i32
    %c0_i32_0 = arith.constant 0 : i32
    return %arg0, %c0_i32 : i32, i32
  }
}

module attributes {stable_mosaic.version = 11 : i64} {
  func.func @_ffn_res_ln_kernel(%arg0: i32, %arg1: memref<16x32xf32, #tpu.memory_space<vmem>>, %arg2: memref<32x64xbf16, #tpu.memory_space<vmem>>, %arg3: memref<1x64xf32, #tpu.memory_space<vmem>>, %arg4: memref<64x32xbf16, #tpu.memory_space<vmem>>, %arg5: memref<1x32xf32, #tpu.memory_space<vmem>>, %arg6: memref<1x32xf32, #tpu.memory_space<vmem>>, %arg7: memref<1x32xf32, #tpu.memory_space<vmem>>, %arg8: memref<16x32xf32, #tpu.memory_space<vmem>>) attributes {dimension_semantics = [#tpu.dimension_semantics<parallel>], iteration_bounds = array<i64: 1>, scalar_prefetch = 0 : i64, scratch_operands = 0 : i64, tpu.core_type = #tpu.core_type<tc>, window_params = [{transform_indices = @transform_0, window_bounds = array<i64: 16, 32>}, {pipeline_mode = #tpu.pipeline_mode<synchronous>, transform_indices = @transform_1, window_bounds = array<i64: 32, 64>}, {pipeline_mode = #tpu.pipeline_mode<synchronous>, transform_indices = @transform_2, window_bounds = array<i64: 1, 64>}, {pipeline_mode = #tpu.pipeline_mode<synchronous>, transform_indices = @transform_3, window_bounds = array<i64: 64, 32>}, {pipeline_mode = #tpu.pipeline_mode<synchronous>, transform_indices = @transform_4, window_bounds = array<i64: 1, 32>}, {pipeline_mode = #tpu.pipeline_mode<synchronous>, transform_indices = @transform_5, window_bounds = array<i64: 1, 32>}, {pipeline_mode = #tpu.pipeline_mode<synchronous>, transform_indices = @transform_6, window_bounds = array<i64: 1, 32>}, {transform_indices = @transform_7, window_bounds = array<i64: 16, 32>}]} {
    %c0 = arith.constant 0 : index
    %c0_0 = arith.constant 0 : index
    %0 = vector.load %arg1[%c0, %c0_0] : memref<16x32xf32, #tpu.memory_space<vmem>>, vector<16x32xf32>
    %1 = arith.truncf %0 : vector<16x32xf32> to vector<16x32xbf16>
    %c0_1 = arith.constant 0 : index
    %c0_2 = arith.constant 0 : index
    %2 = vector.load %arg2[%c0_1, %c0_2] : memref<32x64xbf16, #tpu.memory_space<vmem>>, vector<32x64xbf16>
    %cst = arith.constant dense<0.000000e+00> : vector<16x64xf32>
    %3 = tpu.matmul %1, %2, %cst {dimension_numbers = #tpu.dot_dimension_numbers<[1], [0], [0], [1], [0, 0, 1, 1], [], []>} : vector<16x32xbf16>, vector<32x64xbf16>, vector<16x64xf32> -> vector<16x64xf32>
    %c0_3 = arith.constant 0 : index
    %c0_4 = arith.constant 0 : index
    %4 = vector.load %arg3[%c0_3, %c0_4] : memref<1x64xf32, #tpu.memory_space<vmem>>, vector<1x64xf32>
    %5 = vector.broadcast %4 : vector<1x64xf32> to vector<16x64xf32>
    %6 = arith.addf %3, %5 : vector<16x64xf32>
    %cst_5 = arith.constant 5.000000e-01 : f32
    %7 = vector.broadcast %cst_5 : f32 to vector<16x64xf32>
    %8 = arith.mulf %7, %6 : vector<16x64xf32>
    %cst_6 = arith.constant 1.41421354 : f32
    %9 = vector.broadcast %cst_6 : f32 to vector<16x64xf32>
    %10 = arith.divf %6, %9 : vector<16x64xf32>
    %11 = math.erf %10 : vector<16x64xf32>
    %cst_7 = arith.constant 1.000000e+00 : f32
    %12 = vector.broadcast %cst_7 : f32 to vector<16x64xf32>
    %13 = arith.addf %12, %11 : vector<16x64xf32>
    %14 = arith.mulf %8, %13 : vector<16x64xf32>
    %15 = arith.truncf %14 : vector<16x64xf32> to vector<16x64xbf16>
    %c0_8 = arith.constant 0 : index
    %c0_9 = arith.constant 0 : index
    %16 = vector.load %arg4[%c0_8, %c0_9] : memref<64x32xbf16, #tpu.memory_space<vmem>>, vector<64x32xbf16>
    %cst_10 = arith.constant dense<0.000000e+00> : vector<16x32xf32>
    %17 = tpu.matmul %15, %16, %cst_10 {dimension_numbers = #tpu.dot_dimension_numbers<[1], [0], [0], [1], [0, 0, 1, 1], [], []>} : vector<16x64xbf16>, vector<64x32xbf16>, vector<16x32xf32> -> vector<16x32xf32>
    %c0_11 = arith.constant 0 : index
    %c0_12 = arith.constant 0 : index
    %18 = vector.load %arg5[%c0_11, %c0_12] : memref<1x32xf32, #tpu.memory_space<vmem>>, vector<1x32xf32>
    %19 = vector.broadcast %18 : vector<1x32xf32> to vector<16x32xf32>
    %20 = arith.addf %17, %19 : vector<16x32xf32>
    %21 = arith.addf %20, %0 : vector<16x32xf32>
    %c0_13 = arith.constant 0 : index
    %c0_14 = arith.constant 0 : index
    %22 = vector.load %arg6[%c0_13, %c0_14] : memref<1x32xf32, #tpu.memory_space<vmem>>, vector<1x32xf32>
    %c0_15 = arith.constant 0 : index
    %c0_16 = arith.constant 0 : index
    %23 = vector.load %arg7[%c0_15, %c0_16] : memref<1x32xf32, #tpu.memory_space<vmem>>, vector<1x32xf32>
    %cst_17 = arith.constant dense<0.000000e+00> : vector<16xf32>
    %24 = vector.multi_reduction <add>, %21, %cst_17 [1] : vector<16x32xf32> to vector<16xf32>
    %25 = vector.shape_cast %24 : vector<16xf32> to vector<16x1xf32>
    %cst_18 = arith.constant 3.200000e+01 : f32
    %26 = vector.broadcast %cst_18 : f32 to vector<16x1xf32>
    %27 = arith.divf %25, %26 : vector<16x1xf32>
    %28 = vector.broadcast %27 : vector<16x1xf32> to vector<16x32xf32>
    %29 = arith.subf %21, %28 : vector<16x32xf32>
    %30 = arith.mulf %29, %29 : vector<16x32xf32>
    %cst_19 = arith.constant dense<0.000000e+00> : vector<16xf32>
    %31 = vector.multi_reduction <add>, %30, %cst_19 [1] : vector<16x32xf32> to vector<16xf32>
    %32 = vector.shape_cast %31 : vector<16xf32> to vector<16x1xf32>
    %cst_20 = arith.constant 3.200000e+01 : f32
    %33 = vector.broadcast %cst_20 : f32 to vector<16x1xf32>
    %34 = arith.divf %32, %33 : vector<16x1xf32>
    %cst_21 = arith.constant 9.99999974E-6 : f32
    %35 = vector.broadcast %cst_21 : f32 to vector<16x1xf32>
    %36 = arith.addf %34, %35 : vector<16x1xf32>
    %37 = math.rsqrt %36 : vector<16x1xf32>
    %38 = vector.broadcast %37 : vector<16x1xf32> to vector<16x32xf32>
    %39 = arith.mulf %29, %38 : vector<16x32xf32>
    %40 = vector.broadcast %22 : vector<1x32xf32> to vector<16x32xf32>
    %41 = arith.mulf %39, %40 : vector<16x32xf32>
    %42 = vector.broadcast %23 : vector<1x32xf32> to vector<16x32xf32>
    %43 = arith.addf %41, %42 : vector<16x32xf32>
    %c0_22 = arith.constant 0 : index
    %c0_23 = arith.constant 0 : index
    %44 = vector.load %arg8[%c0_22, %c0_23] : memref<16x32xf32, #tpu.memory_space<vmem>>, vector<16x32xf32>
    tpu.vector_store %arg8[%c0_22, %c0_23], %43 {strides = array<i32>} : memref<16x32xf32, #tpu.memory_space<vmem>>, vector<16x32xf32>,
    return
  }
  func.func @transform_0(%arg0: i32) -> (i32, i32) {
    %c0_i32 = arith.constant 0 : i32
    %c0_i32_0 = arith.constant 0 : i32
    return %arg0, %c0_i32 : i32, i32
  }
  func.func @transform_1(%arg0: i32) -> (i32, i32) {
    %c0_i32 = arith.constant 0 : i32
    %c0_i32_0 = arith.constant 0 : i32
    %c0_i32_1 = arith.constant 0 : i32
    return %c0_i32, %c0_i32_0 : i32, i32
  }
  func.func @transform_2(%arg0: i32) -> (i32, i32) {
    %c0_i32 = arith.constant 0 : i32
    %c0_i32_0 = arith.constant 0 : i32
    %c0_i32_1 = arith.constant 0 : i32
    return %c0_i32, %c0_i32_0 : i32, i32
  }
  func.func @transform_3(%arg0: i32) -> (i32, i32) {
    %c0_i32 = arith.constant 0 : i32
    %c0_i32_0 = arith.constant 0 : i32
    %c0_i32_1 = arith.constant 0 : i32
    return %c0_i32, %c0_i32_0 : i32, i32
  }
  func.func @transform_4(%arg0: i32) -> (i32, i32) {
    %c0_i32 = arith.constant 0 : i32
    %c0_i32_0 = arith.constant 0 : i32
    %c0_i32_1 = arith.constant 0 : i32
    return %c0_i32, %c0_i32_0 : i32, i32
  }
  func.func @transform_5(%arg0: i32) -> (i32, i32) {
    %c0_i32 = arith.constant 0 : i32
    %c0_i32_0 = arith.constant 0 : i32
    %c0_i32_1 = arith.constant 0 : i32
    return %c0_i32, %c0_i32_0 : i32, i32
  }
  func.func @transform_6(%arg0: i32) -> (i32, i32) {
    %c0_i32 = arith.constant 0 : i32
    %c0_i32_0 = arith.constant 0 : i32
    %c0_i32_1 = arith.constant 0 : i32
    return %c0_i32, %c0_i32_0 : i32, i32
  }
  func.func @transform_7(%arg0: i32) -> (i32, i32) {
    %c0_i32 = arith.constant 0 : i32
    %c0_i32_0 = arith.constant 0 : i32
    return %arg0, %c0_i32 : i32, i32
  }
}

module attributes {stable_mosaic.version = 11 : i64} {
  func.func @_head_kernel(%arg0: i32, %arg1: memref<16x32xf32, #tpu.memory_space<vmem>>, %arg2: memref<32x32xbf16, #tpu.memory_space<vmem>>, %arg3: memref<1x32xf32, #tpu.memory_space<vmem>>, %arg4: memref<1x32xf32, #tpu.memory_space<vmem>>, %arg5: memref<1x32xf32, #tpu.memory_space<vmem>>, %arg6: memref<32x128xbf16, #tpu.memory_space<vmem>>, %arg7: memref<1x128xf32, #tpu.memory_space<vmem>>, %arg8: memref<16x128xf32, #tpu.memory_space<vmem>>) attributes {dimension_semantics = [#tpu.dimension_semantics<parallel>], iteration_bounds = array<i64: 1>, scalar_prefetch = 0 : i64, scratch_operands = 0 : i64, tpu.core_type = #tpu.core_type<tc>, window_params = [{transform_indices = @transform_0, window_bounds = array<i64: 16, 32>}, {pipeline_mode = #tpu.pipeline_mode<synchronous>, transform_indices = @transform_1, window_bounds = array<i64: 32, 32>}, {pipeline_mode = #tpu.pipeline_mode<synchronous>, transform_indices = @transform_2, window_bounds = array<i64: 1, 32>}, {pipeline_mode = #tpu.pipeline_mode<synchronous>, transform_indices = @transform_3, window_bounds = array<i64: 1, 32>}, {pipeline_mode = #tpu.pipeline_mode<synchronous>, transform_indices = @transform_4, window_bounds = array<i64: 1, 32>}, {pipeline_mode = #tpu.pipeline_mode<synchronous>, transform_indices = @transform_5, window_bounds = array<i64: 32, 128>}, {pipeline_mode = #tpu.pipeline_mode<synchronous>, transform_indices = @transform_6, window_bounds = array<i64: 1, 128>}, {transform_indices = @transform_7, window_bounds = array<i64: 16, 128>}]} {
    %c0 = arith.constant 0 : index
    %c0_0 = arith.constant 0 : index
    %0 = vector.load %arg1[%c0, %c0_0] : memref<16x32xf32, #tpu.memory_space<vmem>>, vector<16x32xf32>
    %1 = arith.truncf %0 : vector<16x32xf32> to vector<16x32xbf16>
    %c0_1 = arith.constant 0 : index
    %c0_2 = arith.constant 0 : index
    %2 = vector.load %arg2[%c0_1, %c0_2] : memref<32x32xbf16, #tpu.memory_space<vmem>>, vector<32x32xbf16>
    %cst = arith.constant dense<0.000000e+00> : vector<16x32xf32>
    %3 = tpu.matmul %1, %2, %cst {dimension_numbers = #tpu.dot_dimension_numbers<[1], [0], [0], [1], [0, 0, 1, 1], [], []>} : vector<16x32xbf16>, vector<32x32xbf16>, vector<16x32xf32> -> vector<16x32xf32>
    %c0_3 = arith.constant 0 : index
    %c0_4 = arith.constant 0 : index
    %4 = vector.load %arg3[%c0_3, %c0_4] : memref<1x32xf32, #tpu.memory_space<vmem>>, vector<1x32xf32>
    %5 = vector.broadcast %4 : vector<1x32xf32> to vector<16x32xf32>
    %6 = arith.addf %3, %5 : vector<16x32xf32>
    %cst_5 = arith.constant 5.000000e-01 : f32
    %7 = vector.broadcast %cst_5 : f32 to vector<16x32xf32>
    %8 = arith.mulf %7, %6 : vector<16x32xf32>
    %cst_6 = arith.constant 1.41421354 : f32
    %9 = vector.broadcast %cst_6 : f32 to vector<16x32xf32>
    %10 = arith.divf %6, %9 : vector<16x32xf32>
    %11 = math.erf %10 : vector<16x32xf32>
    %cst_7 = arith.constant 1.000000e+00 : f32
    %12 = vector.broadcast %cst_7 : f32 to vector<16x32xf32>
    %13 = arith.addf %12, %11 : vector<16x32xf32>
    %14 = arith.mulf %8, %13 : vector<16x32xf32>
    %c0_8 = arith.constant 0 : index
    %c0_9 = arith.constant 0 : index
    %15 = vector.load %arg4[%c0_8, %c0_9] : memref<1x32xf32, #tpu.memory_space<vmem>>, vector<1x32xf32>
    %c0_10 = arith.constant 0 : index
    %c0_11 = arith.constant 0 : index
    %16 = vector.load %arg5[%c0_10, %c0_11] : memref<1x32xf32, #tpu.memory_space<vmem>>, vector<1x32xf32>
    %cst_12 = arith.constant dense<0.000000e+00> : vector<16xf32>
    %17 = vector.multi_reduction <add>, %14, %cst_12 [1] : vector<16x32xf32> to vector<16xf32>
    %18 = vector.shape_cast %17 : vector<16xf32> to vector<16x1xf32>
    %cst_13 = arith.constant 3.200000e+01 : f32
    %19 = vector.broadcast %cst_13 : f32 to vector<16x1xf32>
    %20 = arith.divf %18, %19 : vector<16x1xf32>
    %21 = vector.broadcast %20 : vector<16x1xf32> to vector<16x32xf32>
    %22 = arith.subf %14, %21 : vector<16x32xf32>
    %23 = arith.mulf %22, %22 : vector<16x32xf32>
    %cst_14 = arith.constant dense<0.000000e+00> : vector<16xf32>
    %24 = vector.multi_reduction <add>, %23, %cst_14 [1] : vector<16x32xf32> to vector<16xf32>
    %25 = vector.shape_cast %24 : vector<16xf32> to vector<16x1xf32>
    %cst_15 = arith.constant 3.200000e+01 : f32
    %26 = vector.broadcast %cst_15 : f32 to vector<16x1xf32>
    %27 = arith.divf %25, %26 : vector<16x1xf32>
    %cst_16 = arith.constant 9.99999974E-6 : f32
    %28 = vector.broadcast %cst_16 : f32 to vector<16x1xf32>
    %29 = arith.addf %27, %28 : vector<16x1xf32>
    %30 = math.rsqrt %29 : vector<16x1xf32>
    %31 = vector.broadcast %30 : vector<16x1xf32> to vector<16x32xf32>
    %32 = arith.mulf %22, %31 : vector<16x32xf32>
    %33 = vector.broadcast %15 : vector<1x32xf32> to vector<16x32xf32>
    %34 = arith.mulf %32, %33 : vector<16x32xf32>
    %35 = vector.broadcast %16 : vector<1x32xf32> to vector<16x32xf32>
    %36 = arith.addf %34, %35 : vector<16x32xf32>
    %37 = arith.truncf %36 : vector<16x32xf32> to vector<16x32xbf16>
    %c0_17 = arith.constant 0 : index
    %c0_18 = arith.constant 0 : index
    %38 = vector.load %arg6[%c0_17, %c0_18] : memref<32x128xbf16, #tpu.memory_space<vmem>>, vector<32x128xbf16>
    %cst_19 = arith.constant dense<0.000000e+00> : vector<16x128xf32>
    %39 = tpu.matmul %37, %38, %cst_19 {dimension_numbers = #tpu.dot_dimension_numbers<[1], [0], [0], [1], [0, 0, 1, 1], [], []>} : vector<16x32xbf16>, vector<32x128xbf16>, vector<16x128xf32> -> vector<16x128xf32>
    %c0_20 = arith.constant 0 : index
    %c0_21 = arith.constant 0 : index
    %40 = vector.load %arg7[%c0_20, %c0_21] : memref<1x128xf32, #tpu.memory_space<vmem>>, vector<1x128xf32>
    %41 = vector.broadcast %40 : vector<1x128xf32> to vector<16x128xf32>
    %42 = arith.addf %39, %41 : vector<16x128xf32>
    %c0_22 = arith.constant 0 : index
    %c0_23 = arith.constant 0 : index
    %43 = vector.load %arg8[%c0_22, %c0_23] : memref<16x128xf32, #tpu.memory_space<vmem>>, vector<16x128xf32>
    tpu.vector_store %arg8[%c0_22, %c0_23], %42 {strides = array<i32>} : memref<16x128xf32, #tpu.memory_space<vmem>>, vector<16x128xf32>,
    return
  }
  func.func @transform_0(%arg0: i32) -> (i32, i32) {
    %c0_i32 = arith.constant 0 : i32
    %c0_i32_0 = arith.constant 0 : i32
    return %arg0, %c0_i32 : i32, i32
  }
  func.func @transform_1(%arg0: i32) -> (i32, i32) {
    %c0_i32 = arith.constant 0 : i32
    %c0_i32_0 = arith.constant 0 : i32
    %c0_i32_1 = arith.constant 0 : i32
    return %c0_i32, %c0_i32_0 : i32, i32
  }
  func.func @transform_2(%arg0: i32) -> (i32, i32) {
    %c0_i32 = arith.constant 0 : i32
    %c0_i32_0 = arith.constant 0 : i32
    %c0_i32_1 = arith.constant 0 : i32
    return %c0_i32, %c0_i32_0 : i32, i32
  }
  func.func @transform_3(%arg0: i32) -> (i32, i32) {
    %c0_i32 = arith.constant 0 : i32
    %c0_i32_0 = arith.constant 0 : i32
    %c0_i32_1 = arith.constant 0 : i32
    return %c0_i32, %c0_i32_0 : i32, i32
  }
  func.func @transform_4(%arg0: i32) -> (i32, i32) {
    %c0_i32 = arith.constant 0 : i32
    %c0_i32_0 = arith.constant 0 : i32
    %c0_i32_1 = arith.constant 0 : i32
    return %c0_i32, %c0_i32_0 : i32, i32
  }
  func.func @transform_5(%arg0: i32) -> (i32, i32) {
    %c0_i32 = arith.constant 0 : i32
    %c0_i32_0 = arith.constant 0 : i32
    %c0_i32_1 = arith.constant 0 : i32
    return %c0_i32, %c0_i32_0 : i32, i32
  }
  func.func @transform_6(%arg0: i32) -> (i32, i32) {
    %c0_i32 = arith.constant 0 : i32
    %c0_i32_0 = arith.constant 0 : i32
    %c0_i32_1 = arith.constant 0 : i32
    return %c0_i32, %c0_i32_0 : i32, i32
  }
  func.func @transform_7(%arg0: i32) -> (i32, i32) {
    %c0_i32 = arith.constant 0 : i32
    %c0_i32_0 = arith.constant 0 : i32
    return %arg0, %c0_i32 : i32, i32
  }
}

</mosaic_0001>

<llo_original>
// kernel: superseg_forward.10
$region0: #{superseg_forward.10}
  #allocation0 [shape = 'u32[]', space=smem, size = 0x4, offset = 0x4, fixed_abs, tag = 'smem constant byte address 0x4 - core index']
  #allocation1 [shape = 'u32[144,128]{1,0:T(1,128)}', space=vmem, size = 0x12000, scoped, tag = 'internal scratch']
  %s0 = inlined_call_operand.vmem [shape: f32[16,32], index: 0, kind: input, shape index: {}]
  %s1 = inlined_call_operand.vmem [shape: f32[1,32], index: 1, kind: input, shape index: {}]
  %s2 = inlined_call_operand.vmem [shape: f32[1,32], index: 2, kind: input, shape index: {}]
  %s3 = inlined_call_operand.vmem [shape: f32[16,32], index: 3, kind: output, shape index: {}]
  %s4 = sld [smem:[#allocation0]]
  $region22: #{superseg_forward.10} parent=0
    _
  %s6 = ssub.s32 1, %s4
  %s7 = scalar_select 0, %s6, %s4
  // Predicated region
  $region2: #{superseg_forward.10} parent=0 // pred_check
    _
  $region3: #{superseg_forward.10} parent=0 // pred_check_branch
    %9 = sbr.rel (0) target = $region5
  $region4: #{superseg_forward.10} parent=0 // pred_region
    _
  $region5: #{superseg_forward.10} parent=0 // pred_fallthru
    _
  // Predicated region
  $region6: #{superseg_forward.10} parent=0 // pred_check
    _
  $region7: #{superseg_forward.10} parent=0 // pred_check_branch
    %11 = sbr.rel (0) target = $region9
  $region8: #{superseg_forward.10} parent=0 // pred_region
    _
  $region9: #{superseg_forward.10} parent=0 // pred_fallthru
    _
  // Predicated region
  $region10: #{superseg_forward.10} parent=0 // pred_check
    _
  $region11: #{superseg_forward.10} parent=0 // pred_check_branch
    %13 = sbr.rel (0) target = $region13
  $region12: #{superseg_forward.10} parent=0 // pred_region
    _
  $region13: #{superseg_forward.10} parent=0 // pred_fallthru
    _
  %v14 = vld [vmem:[%s0] sm:$0xff]
  %v15 = vld [vmem:[%s0 + $0x8] sm:$0xff]
  %v16 = vld [vmem:[%s1] sm:$0x1]
  %v17 = vld [vmem:[%s2] sm:$0x1]
  %vm18 = vcmask 261120
  %v19 = vsel %vm18, %v14, 0.0
  %20 = vadd.xlane.f32.xlu0 %v19
  %v21 = vpop.xlane.xlu0 %20
  %v22 = vsel %vm18, %v15, 0.0
  %23 = vadd.xlane.f32.xlu0 %v22
  %v24 = vpop.xlane.xlu0 %23
  %v25 = vrcp.pop 32.0
  %v26 = vmul.f32 %v21, %v25
  %v27 = vmul.f32 %v24, %v25
  %v28 = vsub.f32 %v14, %v26
  %v29 = vsub.f32 %v15, %v27
  %v30 = vmul.f32 %v28, %v28
  %v31 = vmul.f32 %v29, %v29
  %v32 = vsel %vm18, %v30, 0.0
  %33 = vadd.xlane.f32.xlu0 %v32
  %v34 = vpop.xlane.xlu0 %33
  %v35 = vsel %vm18, %v31, 0.0
  %36 = vadd.xlane.f32.xlu0 %v35
  %v37 = vpop.xlane.xlu0 %36
  %v38 = vmul.f32 %v34, %v25
  %v39 = vmul.f32 %v37, %v25
  %v40 = vadd.f32 %v38, 1e-05
  %v41 = vadd.f32 %v39, 1e-05
  %v42 = vrsqrt.pop %v40
  %v43 = vrsqrt.pop %v41
  %v44 = vmul.f32 %v28, %v42
  %v45 = vmul.f32 %v29, %v43
  %v47 = vlaneseq
  %v48 = vshrl.u32 %v47, 7
  %v49 = vsub.s32 0, %v48
  %v50 = vrot.slane %v16, %v49
  %v52 = vmul.f32 %v44, %v50
  %v53 = vmul.f32 %v45, %v50
  %v55 = vlaneseq
  %v56 = vshrl.u32 %v55, 7
  %v57 = vsub.s32 0, %v56
  %v58 = vrot.slane %v17, %v57
  %v60 = vadd.f32 %v52, %v58
  %v61 = vadd.f32 %v53, %v58
  %62 = vst.msk [vmem:[%s3] sm:$0xff] %vm18, %v60
  %63 = vst.msk [vmem:[%s3 + $0x8] sm:$0xff] %vm18, %v61
  // Predicated region
  $region14: #{superseg_forward.10} parent=0 // pred_check
    _
  $region15: #{superseg_forward.10} parent=0 // pred_check_branch
    %65 = sbr.rel (0) target = $region17
  $region16: #{superseg_forward.10} parent=0 // pred_region
    _
  $region17: #{superseg_forward.10} parent=0 // pred_fallthru
    _
  // Predicated region
  $region18: #{superseg_forward.10} parent=0 // pred_check
    _
  $region19: #{superseg_forward.10} parent=0 // pred_check_branch
    %67 = sbr.rel (0) target = $region21
  $region20: #{superseg_forward.10} parent=0 // pred_region
    _
  $region21: #{superseg_forward.10} parent=0 // pred_fallthru
    _

// kernel: superseg_forward.11
$region0: #{superseg_forward.11}
  #allocation0 [shape = 'u32[]', space=smem, size = 0x4, offset = 0x4, fixed_abs, tag = 'smem constant byte address 0x4 - core index']
  #allocation1 [shape = 'u32[144,128]{1,0:T(1,128)}', space=vmem, size = 0x12000, scoped, tag = 'internal scratch']
  %s0 = inlined_call_operand.vmem [shape: f32[16,32], index: 0, kind: input, shape index: {}]
  %s1 = inlined_call_operand.vmem [shape: bf16[32,96], index: 1, kind: input, shape index: {}]
  %s2 = inlined_call_operand.vmem [shape: f32[1,96], index: 2, kind: input, shape index: {}]
  %s3 = inlined_call_operand.vmem [shape: bf16[16,96], index: 3, kind: output, shape index: {}]
  %s4 = sld [smem:[#allocation0]]
  $region22: #{superseg_forward.11} parent=0
    _
  %s6 = ssub.s32 1, %s4
  %s7 = scalar_select 0, %s6, %s4
  // Predicated region
  $region2: #{superseg_forward.11} parent=0 // pred_check
    _
  $region3: #{superseg_forward.11} parent=0 // pred_check_branch
    %9 = sbr.rel (0) target = $region5
  $region4: #{superseg_forward.11} parent=0 // pred_region
    _
  $region5: #{superseg_forward.11} parent=0 // pred_fallthru
    _
  // Predicated region
  $region6: #{superseg_forward.11} parent=0 // pred_check
    _
  $region7: #{superseg_forward.11} parent=0 // pred_check_branch
    %11 = sbr.rel (0) target = $region9
  $region8: #{superseg_forward.11} parent=0 // pred_region
    _
  $region9: #{superseg_forward.11} parent=0 // pred_fallthru
    _
  // Predicated region
  $region10: #{superseg_forward.11} parent=0 // pred_check
    _
  $region11: #{superseg_forward.11} parent=0 // pred_check_branch
    %13 = sbr.rel (0) target = $region13
  $region12: #{superseg_forward.11} parent=0 // pred_region
    _
  $region13: #{superseg_forward.11} parent=0 // pred_fallthru
    _
  %v15 = vld [vmem:[%s0] sm:$0xff]
  %v16 = vld [vmem:[%s0 + $0x8] sm:$0xff]
  %v17 = vpack.c.bf16 %v16, %v15
  %v18 = vld [vmem:[%s1] sm:$0xf]
  %v19 = vld [vmem:[%s1 + $0x4] sm:$0xf]
  %v20 = vld [vmem:[%s1 + $0x8] sm:$0xf]
  %v21 = vld [vmem:[%s1 + $0xc] sm:$0xf]
  %v22 = vld [vmem:[%s2] sm:$0x1]
  %v24 = vlaneseq
  %v25 = vshrl.u32 %v24, 7
  %v26 = vsub.s32 0, %v25
  %v27 = vrot.slane %v22, %v26
  %v33 = vunpack.c.l.b16 %v18
  %v34 = vunpack.c.l.b16 %v19
  %v35 = vunpack.c.l.b16 %v20
  %v36 = vunpack.c.l.b16 %v21
  %v37 = vpack.c.b16 %v34, %v33
  %v38 = vpack.c.b16 %v36, %v35
  %vm41 = vcmask 261120
  %v43 = vsel %vm41, %v17, 0
  %45 = vmatprep.subr.bf16.mxu0 0
  %46 = vmatpush1.bf16.msra.mxu0 %v37
  %47 = vmatprep.subr.bf16.mxu0 0
  %48 = vmatpush1.bf16.msra.mxu0 %v38
  %49 = vmatprep.subr.bf16.mxu0 0
  %50 = vmatpush1.bf16.msra.mxu0 0
  %51 = vmatprep.subr.bf16.mxu0 0
  %52 = vmatpush1.bf16.msra.mxu0 0
  %53 = vmatprep.subr.bf16.mxu0 0
  %54 = vmatpush1.bf16.msra.mxu0 0
  %55 = vmatprep.subr.bf16.mxu0 0
  %56 = vmatpush1.bf16.msra.mxu0 0
  %57 = vmatprep.subr.bf16.mxu0 0
  %58 = vmatpush1.bf16.msra.mxu0 0
  %59 = vmatprep.subr.bf16.mxu0 0
  %60 = vmatpush1.bf16.msra.mxu0 0
  %61 = vmatprep.subr.bf16.mxu0 0
  %62 = vmatpush1.bf16.msra.mxu0 0
  %63 = vmatprep.subr.bf16.mxu0 0
  %64 = vmatpush1.bf16.msra.mxu0 0
  %65 = vmatprep.subr.bf16.mxu0 0
  %66 = vmatpush1.bf16.msra.mxu0 0
  %67 = vmatprep.subr.bf16.mxu0 0
  %68 = vmatpush1.bf16.msra.mxu0 0
  %69 = vmatprep.subr.bf16.mxu0 0
  %70 = vmatpush1.bf16.msra.mxu0 0
  %71 = vmatprep.subr.bf16.mxu0 0
  %72 = vmatpush1.bf16.msra.mxu0 0
  %73 = vmatprep.subr.bf16.mxu0 0
  %74 = vmatpush1.bf16.msra.mxu0 0
  %75 = vmatprep.subr.bf16.mxu0 0
  %76 = vmatpush1.bf16.msra.mxu0 0
  %77 = vmatprep.mubr.bf16.mxu0 0
  %78 = vmatmul.mubr.bf16.gmra.mrb[0].mxu0 %v43
  %v79 = vpop.f32.mrb[0].mxu0
  %v80 = vadd.f32 %v27, %v79
  %v81 = vpop.f32.mrb[0].mxu0
  %v82 = vpop.f32.mrb[0].mxu0
  %v83 = vadd.f32 %v27, %v82
  %v84 = vpop.f32.mrb[0].mxu0
  %85 = vdwg.mxu0
  %v86 = vpack.c.bf16 %v83, %v80
  %v88 = vunpack.c.l.b16 %v86
  %v89 = vunpack.c.h.b16 %v86
  %v90 = vpack.c.b16 %v88, %v88
  %v91 = vpack.c.b16 %v89, %v89
  %vm94 = vcmask 781312
  %95 = vst.msk [vmem:[%s3] sm:$0xf] %vm94, %v90
  %96 = vst.msk [vmem:[%s3 + $0x4] sm:$0xf] %vm94, %v91
  // Predicated region
  $region14: #{superseg_forward.11} parent=0 // pred_check
    _
  $region15: #{superseg_forward.11} parent=0 // pred_check_branch
    %98 = sbr.rel (0) target = $region17
  $region16: #{superseg_forward.11} parent=0 // pred_region
    _
  $region17: #{superseg_forward.11} parent=0 // pred_fallthru
    _
  // Predicated region
  $region18: #{superseg_forward.11} parent=0 // pred_check
    _
  $region19: #{superseg_forward.11} parent=0 // pred_check_branch
    %100 = sbr.rel (0) target = $region21
  $region20: #{superseg_forward.11} parent=0 // pred_region
    _
  $region21: #{superseg_forward.11} parent=0 // pred_fallthru
    _

// kernel: superseg_forward.13
$region0: #{superseg_forward.13}
  #allocation0 [shape = 'u32[]', space=smem, size = 0x4, offset = 0x4, fixed_abs, tag = 'smem constant byte address 0x4 - core index']
  #allocation1 [shape = 'u32[144,128]{1,0:T(1,128)}', space=vmem, size = 0x12000, scoped, tag = 'internal scratch']
  %s0 = inlined_call_operand.vmem [shape: bf16[16,32], index: 0, kind: input, shape index: {}]
  %s1 = inlined_call_operand.vmem [shape: bf16[32,32], index: 1, kind: input, shape index: {}]
  %s2 = inlined_call_operand.vmem [shape: f32[1,32], index: 2, kind: input, shape index: {}]
  %s3 = inlined_call_operand.vmem [shape: f32[16,32], index: 3, kind: input, shape index: {}]
  %s4 = inlined_call_operand.vmem [shape: f32[1,32], index: 4, kind: input, shape index: {}]
  %s5 = inlined_call_operand.vmem [shape: f32[1,32], index: 5, kind: input, shape index: {}]
  %s6 = inlined_call_operand.vmem [shape: f32[16,32], index: 6, kind: output, shape index: {}]
  %s7 = sld [smem:[#allocation0]]
  $region34: #{superseg_forward.13} parent=0
    _
  %s9 = ssub.s32 1, %s7
  %s10 = scalar_select 0, %s9, %s7
  // Predicated region
  $region2: #{superseg_forward.13} parent=0 // pred_check
    _
  $region3: #{superseg_forward.13} parent=0 // pred_check_branch
    %12 = sbr.rel (0) target = $region5
  $region4: #{superseg_forward.13} parent=0 // pred_region
    _
  $region5: #{superseg_forward.13} parent=0 // pred_fallthru
    _
  // Predicated region
  $region6: #{superseg_forward.13} parent=0 // pred_check
    _
  $region7: #{superseg_forward.13} parent=0 // pred_check_branch
    %14 = sbr.rel (0) target = $region9
  $region8: #{superseg_forward.13} parent=0 // pred_region
    _
  $region9: #{superseg_forward.13} parent=0 // pred_fallthru
    _
  // Predicated region
  $region10: #{superseg_forward.13} parent=0 // pred_check
    _
  $region11: #{superseg_forward.13} parent=0 // pred_check_branch
    %16 = sbr.rel (0) target = $region13
  $region12: #{superseg_forward.13} parent=0 // pred_region
    _
  $region13: #{superseg_forward.13} parent=0 // pred_fallthru
    _
  // Predicated region
  $region14: #{superseg_forward.13} parent=0 // pred_check
    _
  $region15: #{superseg_forward.13} parent=0 // pred_check_branch
    %18 = sbr.rel (0) target = $region17
  $region16: #{superseg_forward.13} parent=0 // pred_region
    _
  $region17: #{superseg_forward.13} parent=0 // pred_fallthru
    _
  // Predicated region
  $region18: #{superseg_forward.13} parent=0 // pred_check
    _
  $region19: #{superseg_forward.13} parent=0 // pred_check_branch
    %20 = sbr.rel (0) target = $region21
  $region20: #{superseg_forward.13} parent=0 // pred_region
    _
  $region21: #{superseg_forward.13} parent=0 // pred_fallthru
    _
  // Predicated region
  $region22: #{superseg_forward.13} parent=0 // pred_check
    _
  $region23: #{superseg_forward.13} parent=0 // pred_check_branch
    %22 = sbr.rel (0) target = $region25
  $region24: #{superseg_forward.13} parent=0 // pred_region
    _
  $region25: #{superseg_forward.13} parent=0 // pred_fallthru
    _
  %v24 = vld [vmem:[%s0] sm:$0xf]
  %v25 = vld [vmem:[%s0 + $0x4] sm:$0xf]
  %v26 = vld [vmem:[%s1] sm:$0xf]
  %v27 = vld [vmem:[%s1 + $0x4] sm:$0xf]
  %v28 = vld [vmem:[%s1 + $0x8] sm:$0xf]
  %v29 = vld [vmem:[%s1 + $0xc] sm:$0xf]
  %v30 = vld [vmem:[%s2] sm:$0x1]
  %v32 = vlaneseq
  %v33 = vshrl.u32 %v32, 7
  %v34 = vsub.s32 0, %v33
  %v35 = vrot.slane %v30, %v34
  %v39 = vunpack.c.l.b16 %v24
  %v40 = vunpack.c.l.b16 %v25
  %v41 = vpack.c.b16 %v40, %v39
  %v46 = vunpack.c.l.b16 %v26
  %v47 = vunpack.c.l.b16 %v27
  %v48 = vunpack.c.l.b16 %v28
  %v49 = vunpack.c.l.b16 %v29
  %v50 = vpack.c.b16 %v47, %v46
  %v51 = vpack.c.b16 %v49, %v48
  %vm54 = vcmask 261120
  %v56 = vsel %vm54, %v41, 0
  %58 = vmatprep.subr.bf16.mxu0 0
  %59 = vmatpush1.bf16.msra.mxu0 %v50
  %60 = vmatprep.subr.bf16.mxu0 0
  %61 = vmatpush1.bf16.msra.mxu0 %v51
  %62 = vmatprep.subr.bf16.mxu0 0
  %63 = vmatpush1.bf16.msra.mxu0 0
  %64 = vmatprep.subr.bf16.mxu0 0
  %65 = vmatpush1.bf16.msra.mxu0 0
  %66 = vmatprep.subr.bf16.mxu0 0
  %67 = vmatpush1.bf16.msra.mxu0 0
  %68 = vmatprep.subr.bf16.mxu0 0
  %69 = vmatpush1.bf16.msra.mxu0 0
  %70 = vmatprep.subr.bf16.mxu0 0
  %71 = vmatpush1.bf16.msra.mxu0 0
  %72 = vmatprep.subr.bf16.mxu0 0
  %73 = vmatpush1.bf16.msra.mxu0 0
  %74 = vmatprep.subr.bf16.mxu0 0
  %75 = vmatpush1.bf16.msra.mxu0 0
  %76 = vmatprep.subr.bf16.mxu0 0
  %77 = vmatpush1.bf16.msra.mxu0 0
  %78 = vmatprep.subr.bf16.mxu0 0
  %79 = vmatpush1.bf16.msra.mxu0 0
  %80 = vmatprep.subr.bf16.mxu0 0
  %81 = vmatpush1.bf16.msra.mxu0 0
  %82 = vmatprep.subr.bf16.mxu0 0
  %83 = vmatpush1.bf16.msra.mxu0 0
  %84 = vmatprep.subr.bf16.mxu0 0
  %85 = vmatpush1.bf16.msra.mxu0 0
  %86 = vmatprep.subr.bf16.mxu0 0
  %87 = vmatpush1.bf16.msra.mxu0 0
  %88 = vmatprep.subr.bf16.mxu0 0
  %89 = vmatpush1.bf16.msra.mxu0 0
  %90 = vmatprep.mubr.bf16.mxu0 0
  %91 = vmatmul.mubr.bf16.gmra.mrb[0].mxu0 %v56
  %v92 = vpop.f32.mrb[0].mxu0
  %v93 = vadd.f32 %v35, %v92
  %v94 = vpop.f32.mrb[0].mxu0
  %v95 = vpop.f32.mrb[0].mxu0
  %v96 = vadd.f32 %v35, %v95
  %v97 = vpop.f32.mrb[0].mxu0
  %98 = vdwg.mxu0
  %v99 = vld [vmem:[%s3] sm:$0xff]
  %v100 = vld [vmem:[%s3 + $0x8] sm:$0xff]
  %v101 = vadd.f32 %v93, %v99
  %v102 = vadd.f32 %v96, %v100
  %v103 = vld [vmem:[%s4] sm:$0x1]
  %v104 = vld [vmem:[%s5] sm:$0x1]
  %v105 = vsel %vm54, %v101, 0.0
  %106 = vadd.xlane.f32.xlu0 %v105
  %v107 = vpop.xlane.xlu0 %106
  %v108 = vsel %vm54, %v102, 0.0
  %109 = vadd.xlane.f32.xlu0 %v108
  %v110 = vpop.xlane.xlu0 %109
  %v111 = vrcp.pop 32.0
  %v112 = vmul.f32 %v107, %v111
  %v113 = vmul.f32 %v110, %v111
  %v114 = vsub.f32 %v101, %v112
  %v115 = vsub.f32 %v102, %v113
  %v116 = vmul.f32 %v114, %v114
  %v117 = vmul.f32 %v115, %v115
  %v118 = vsel %vm54, %v116, 0.0
  %119 = vadd.xlane.f32.xlu0 %v118
  %v120 = vpop.xlane.xlu0 %119
  %v121 = vsel %vm54, %v117, 0.0
  %122 = vadd.xlane.f32.xlu0 %v121
  %v123 = vpop.xlane.xlu0 %122
  %v124 = vmul.f32 %v120, %v111
  %v125 = vmul.f32 %v123, %v111
  %v126 = vadd.f32 %v124, 1e-05
  %v127 = vadd.f32 %v125, 1e-05
  %v128 = vrsqrt.pop %v126
  %v129 = vrsqrt.pop %v127
  %v130 = vmul.f32 %v114, %v128
  %v131 = vmul.f32 %v115, %v129
  %v133 = vlaneseq
  %v134 = vshrl.u32 %v133, 7
  %v135 = vsub.s32 0, %v134
  %v136 = vrot.slane %v103, %v135
  %v138 = vmul.f32 %v130, %v136
  %v139 = vmul.f32 %v131, %v136
  %v141 = vlaneseq
  %v142 = vshrl.u32 %v141, 7
  %v143 = vsub.s32 0, %v142
  %v144 = vrot.slane %v104, %v143
  %v146 = vadd.f32 %v138, %v144
  %v147 = vadd.f32 %v139, %v144
  %148 = vst.msk [vmem:[%s6] sm:$0xff] %vm54, %v146
  %149 = vst.msk [vmem:[%s6 + $0x8] sm:$0xff] %vm54, %v147
  // Predicated region
  $region26: #{superseg_forward.13} parent=0 // pred_check
    _
  $region27: #{superseg_forward.13} parent=0 // pred_check_branch
    %151 = sbr.rel (0) target = $region29
  $region28: #{superseg_forward.13} parent=0 // pred_region
    _
  $region29: #{superseg_forward.13} parent=0 // pred_fallthru
    _
  // Predicated region
  $region30: #{superseg_forward.13} parent=0 // pred_check
    _
  $region31: #{superseg_forward.13} parent=0 // pred_check_branch
    %153 = sbr.rel (0) target = $region33
  $region32: #{superseg_forward.13} parent=0 // pred_region
    _
  $region33: #{superseg_forward.13} parent=0 // pred_fallthru
    _

// kernel: superseg_forward.12
$region0: #{superseg_forward.12}
  #allocation0 [shape = 'u32[]', space=smem, size = 0x4, offset = 0x4, fixed_abs, tag = 'smem constant byte address 0x4 - core index']
  #allocation1 [shape = 'u32[144,128]{1,0:T(1,128)}', space=vmem, size = 0x12000, scoped, tag = 'internal scratch']
  %s0 = inlined_call_operand.vmem [shape: bf16[2,8,3,2,16], index: 0, kind: input, shape index: {}]
  %s1 = inlined_call_operand.vmem [shape: f32[2,1,8], index: 1, kind: input, shape index: {}]
  %s2 = inlined_call_operand.vmem [shape: bf16[2,8,32], index: 2, kind: output, shape index: {}]
  %s3 = sld [smem:[#allocation0]]
  $region41: #{superseg_forward.12} parent=0
    _
  %s5 = ssub.s32 1, %s3
  %s6 = scalar_select 0, %s5, %s3
  loop: start=0, step=1, limit=4
  $region2: #{superseg_forward.12} parent=0 // loop_pre_header
    _
  $region3: #{superseg_forward.12} parent=0 // loop_header
    %s8 = sphi 0, %s12
    %p9 = scmp.ge.s32.totalorder %s8, 4
    %s18 = sphi 0, %s20
    %s21 = sphi 0, %s18
    %s22 = sphi 0, %s21
    %s38 = sphi 0, %s22
    %s44 = sphi 0, %s46
    %s47 = sphi 0, %s44
    %s48 = sphi 0, %s47
    %s64 = sphi 0, %s48
    %s70 = sphi 0, %s72
    %s73 = sphi 0, %s70
    %s74 = sphi 0, %s73
    %s90 = sphi 0, %s74
  $region4: #{superseg_forward.12} parent=0 // loop_header_branch
    %11 = sbr.rel (%p9) target = $region8
  $region5: #{superseg_forward.12} parent=0 // loop_body
    %s13 = ssub.s32 %s8, 1
    %s14 = ssub.s32 %s8, 2
    %s15 = sadd.s32 %s8, 1
    %s16 = ssub.s32 %s8, %s15
    %p17 = scmp.eq.s32.totalorder %s16, 0
    %s19 = sadd.s32 %s18, 1
    %s20 = scalar_select %p17, %s18, %s19
    %p23 = pneg %p17
    %p24 = scmp.eq.s32.totalorder %s8, 1
    %p25 = por %p23, %p24
    %p26 = scmp.ne.s32.totalorder %s18, %s21
    %p27 = scmp.eq.s32.totalorder %s8, 0
    %p28 = por %p26, %p27
    %p29 = scmp.ne.s32.totalorder %s18, %s21
    %p30 = scmp.eq.s32.totalorder %s13, 1
    %p31 = por %p29, %p30
    %p32 = scmp.ne.s32.totalorder %s21, %s22
    %p33 = scmp.eq.s32.totalorder %s13, 0
    %p34 = por %p32, %p33
    %p35 = scmp.ne.s32.totalorder %s21, %s22
    %p36 = scmp.eq.s32.totalorder %s14, 1
    %p37 = por %p35, %p36
    %p39 = scmp.ne.s32.totalorder %s22, %s38
    %p40 = scmp.eq.s32.totalorder %s14, 0
    %p41 = por %p39, %p40
    %s42 = ssub.s32 %s8, %s15
    %p43 = scmp.eq.s32.totalorder %s42, 0
    %s45 = sadd.s32 %s44, 1
    %s46 = scalar_select %p43, %s44, %s45
    %p49 = pneg %p43
    %p50 = scmp.eq.s32.totalorder %s8, 1
    %p51 = por %p49, %p50
    %p52 = scmp.ne.s32.totalorder %s44, %s47
    %p53 = scmp.eq.s32.totalorder %s8, 0
    %p54 = por %p52, %p53
    %p55 = scmp.ne.s32.totalorder %s44, %s47
    %p56 = scmp.eq.s32.totalorder %s13, 1
    %p57 = por %p55, %p56
    %p58 = scmp.ne.s32.totalorder %s47, %s48
    %p59 = scmp.eq.s32.totalorder %s13, 0
    %p60 = por %p58, %p59
    %p61 = scmp.ne.s32.totalorder %s47, %s48
    %p62 = scmp.eq.s32.totalorder %s14, 1
    %p63 = por %p61, %p62
    %p65 = scmp.ne.s32.totalorder %s48, %s64
    %p66 = scmp.eq.s32.totalorder %s14, 0
    %p67 = por %p65, %p66
    %s68 = ssub.s32 %s8, %s15
    %p69 = scmp.eq.s32.totalorder %s68, 0
    %s71 = sadd.s32 %s70, 1
    %s72 = scalar_select %p69, %s70, %s71
    %p75 = pneg %p69
    %p76 = scmp.eq.s32.totalorder %s8, 1
    %p77 = por %p75, %p76
    %p78 = scmp.ne.s32.totalorder %s70, %s73
    %p79 = scmp.eq.s32.totalorder %s8, 0
    %p80 = por %p78, %p79
    %p81 = scmp.ne.s32.totalorder %s70, %s73
    %p82 = scmp.eq.s32.totalorder %s13, 1
    %p83 = por %p81, %p82
    %p84 = scmp.ne.s32.totalorder %s73, %s74
    %p85 = scmp.eq.s32.totalorder %s13, 0
    %p86 = por %p84, %p85
    %p87 = scmp.ne.s32.totalorder %s73, %s74
    %p88 = scmp.eq.s32.totalorder %s14, 1
    %p89 = por %p87, %p88
    %p91 = scmp.ne.s32.totalorder %s74, %s90
    %p92 = scmp.eq.s32.totalorder %s14, 0
    %p93 = por %p91, %p92
    %p94 = scmp.le.s32.totalorder 1, %s8
    %p95 = scmp.lt.s32.totalorder %s8, 3
    %p96 = pnand %p94, %p95
    %p97 = pneg %p96
    // Predicated region
    $region9: #{superseg_forward.12} parent=5 // pred_check
      _
    $region10: #{superseg_forward.12} parent=5 // pred_check_branch
      %99 = sbr.rel (%p96) target = $region12
    $region11: #{superseg_forward.12} parent=5 // pred_region
      %s100 = ssub.s32 %s8, 1
    $region12: #{superseg_forward.12} parent=5 // pred_fallthru
      _
    %p101 = scmp.lt.s32.totalorder %s8, 2
    // Predicated region
    $region13: #{superseg_forward.12} parent=5 // pred_check
      %p102 = pneg %p101
    $region14: #{superseg_forward.12} parent=5 // pred_check_branch
      %104 = sbr.rel (%p102) target = $region16
    $region15: #{superseg_forward.12} parent=5 // pred_region
      // Predicated region
      $region17: #{superseg_forward.12} parent=15 // pred_check
        %p105 = pneg %p28
      $region18: #{superseg_forward.12} parent=15 // pred_check_branch
        %107 = sbr.rel (%p105) target = $region20
      $region19: #{superseg_forward.12} parent=15 // pred_region
        %p108 = scmp.lt.s32.totalorder %s8, 1
        %s109 = scalar_select %p108, %s8, 1
        %s110 = smul.addr %s109, 24
        %s111 = scalar_lea.vmem %s0, %s110
      $region20: #{superseg_forward.12} parent=15 // pred_fallthru
        _
      // Predicated region
      $region21: #{superseg_forward.12} parent=15 // pred_check
        %p112 = pneg %p54
      $region22: #{superseg_forward.12} parent=15 // pred_check_branch
        %114 = sbr.rel (%p112) target = $region24
      $region23: #{superseg_forward.12} parent=15 // pred_region
        %p115 = scmp.lt.s32.totalorder %s8, 1
        %s116 = scalar_select %p115, %s8, 1
        %s117 = scalar_lea.vmem %s1, %s116
      $region24: #{superseg_forward.12} parent=15 // pred_fallthru
        _
    $region16: #{superseg_forward.12} parent=5 // pred_fallthru
      _
    %p118 = scmp.le.s32.totalorder 1, %s8
    %p119 = scmp.lt.s32.totalorder %s8, 3
    %p120 = pnand %p118, %p119
    %p121 = pneg %p120
    // Predicated region
    $region25: #{superseg_forward.12} parent=5 // pred_check
      _
    $region26: #{superseg_forward.12} parent=5 // pred_check_branch
      %123 = sbr.rel (%p120) target = $region28
    $region27: #{superseg_forward.12} parent=5 // pred_region
      %s124 = ssub.s32 %s8, 1
      %p125 = scmp.lt.s32.totalorder %s13, 1
      %s126 = scalar_select %p125, %s13, 1
      %s127 = smul.addr %s126, 24
      %s128 = scalar_lea.vmem %s0, %s127
      %p129 = pneg %p34
      %p130 = pneg %p31
      %p131 = scmp.lt.s32.totalorder %s13, 1
      %s132 = scalar_select %p131, %s13, 1
      %s133 = scalar_lea.vmem %s1, %s132
      %p134 = pneg %p60
      %p135 = pneg %p57
      %p136 = pneg %p86
      %p137 = pneg %p83
      %p138 = scmp.lt.s32.totalorder %s13, 1
      %s139 = scalar_select %p138, %s13, 1
      %s140 = smul.addr %s139, 4
      %s141 = scalar_lea.vmem %s2, %s140
      %p142 = scmp.lt.s32.totalorder %s13, 1
      %s143 = scalar_select %p142, %s13, 1
      %s144 = smul.addr %s143, 24
      %s145 = scalar_lea.vmem %s0, %s144
      %p146 = scmp.lt.s32.totalorder %s13, 1
      %s147 = scalar_select %p146, %s13, 1
      %s148 = scalar_lea.vmem %s1, %s147
      %p149 = scmp.lt.s32.totalorder %s13, 1
      %s150 = scalar_select %p149, %s13, 1
      %s151 = smul.addr %s150, 4
      %s152 = scalar_lea.vmem %s2, %s151
      %v154 = vld [vmem:[%s145] sm:$0x1]
      %v155 = vld [vmem:[%s145 + $0x1] sm:$0x1]
      %v156 = vld [vmem:[%s145 + $0x2] sm:$0x1]
      %v157 = vld [vmem:[%s145 + $0x3] sm:$0x1]
      %v158 = vld [vmem:[%s145 + $0x4] sm:$0x1]
      %v159 = vld [vmem:[%s145 + $0x5] sm:$0x1]
      %v160 = vld [vmem:[%s145 + $0x6] sm:$0x1]
      %v161 = vld [vmem:[%s145 + $0x7] sm:$0x1]
      %v162 = vld [vmem:[%s145 + $0x8] sm:$0x1]
      %v163 = vld [vmem:[%s145 + $0x9] sm:$0x1]
      %v164 = vld [vmem:[%s145 + $0xa] sm:$0x1]
      %v165 = vld [vmem:[%s145 + $0xb] sm:$0x1]
      %v166 = vld [vmem:[%s145 + $0xc] sm:$0x1]
      %v167 = vld [vmem:[%s145 + $0xd] sm:$0x1]
      %v168 = vld [vmem:[%s145 + $0xe] sm:$0x1]
      %v169 = vld [vmem:[%s145 + $0xf] sm:$0x1]
      %v170 = vld [vmem:[%s145 + $0x10] sm:$0x1]
      %v171 = vld [vmem:[%s145 + $0x11] sm:$0x1]
      %v172 = vld [vmem:[%s145 + $0x12] sm:$0x1]
      %v173 = vld [vmem:[%s145 + $0x13] sm:$0x1]
      %v174 = vld [vmem:[%s145 + $0x14] sm:$0x1]
      %v175 = vld [vmem:[%s145 + $0x15] sm:$0x1]
      %v176 = vld [vmem:[%s145 + $0x16] sm:$0x1]
      %v177 = vld [vmem:[%s145 + $0x17] sm:$0x1]
      %v180 = vpack.i.b16 %v157, %v154
      %v181 = vshrl.u32 %v154, 16
      %v182 = vshrl.u32 %v157, 16
      %v183 = vpack.i.b16 %v182, %v181
      %v186 = vpack.i.b16 %v163, %v160
      %v187 = vshrl.u32 %v160, 16
      %v188 = vshrl.u32 %v163, 16
      %v189 = vpack.i.b16 %v188, %v187
      %v192 = vpack.i.b16 %v169, %v166
      %v193 = vshrl.u32 %v166, 16
      %v194 = vshrl.u32 %v169, 16
      %v195 = vpack.i.b16 %v194, %v193
      %v198 = vpack.i.b16 %v175, %v172
      %v199 = vshrl.u32 %v172, 16
      %v200 = vshrl.u32 %v175, 16
      %v201 = vpack.i.b16 %v200, %v199
      %v204 = vpack.i.b16 %v158, %v155
      %v205 = vshrl.u32 %v155, 16
      %v206 = vshrl.u32 %v158, 16
      %v207 = vpack.i.b16 %v206, %v205
      %v210 = vpack.i.b16 %v164, %v161
      %v211 = vshrl.u32 %v161, 16
      %v212 = vshrl.u32 %v164, 16
      %v213 = vpack.i.b16 %v212, %v211
      %v216 = vpack.i.b16 %v170, %v167
      %v217 = vshrl.u32 %v167, 16
      %v218 = vshrl.u32 %v170, 16
      %v219 = vpack.i.b16 %v218, %v217
      %v222 = vpack.i.b16 %v176, %v173
      %v223 = vshrl.u32 %v173, 16
      %v224 = vshrl.u32 %v176, 16
      %v225 = vpack.i.b16 %v224, %v223
      %v228 = vpack.i.b16 %v159, %v156
      %v229 = vshrl.u32 %v156, 16
      %v230 = vshrl.u32 %v159, 16
      %v231 = vpack.i.b16 %v230, %v229
      %v234 = vpack.i.b16 %v165, %v162
      %v235 = vshrl.u32 %v162, 16
      %v236 = vshrl.u32 %v165, 16
      %v237 = vpack.i.b16 %v236, %v235
      %v240 = vpack.i.b16 %v171, %v168
      %v241 = vshrl.u32 %v168, 16
      %v242 = vshrl.u32 %v171, 16
      %v243 = vpack.i.b16 %v242, %v241
      %v246 = vpack.i.b16 %v177, %v174
      %v247 = vshrl.u32 %v174, 16
      %v248 = vshrl.u32 %v177, 16
      %v249 = vpack.i.b16 %v248, %v247
      %v250 = vld [vmem:[%s148] sm:$0x1]
      %v252 = vlaneseq
      %v253 = vshrl.u32 %v252, 7
      %v254 = vsub.s32 0, %v253
      %v255 = vrot.slane %v250, %v254
      %v257 = vcombine.low %v180, %v186
      %v258 = vcombine.low %v192, %v198
      %v260 = vunpack.c.l.s4 1966171168
      %v261 = vunpack.c.0.s8 %v260
      %v262 = vlaneseq
      %v263 = vshrl.u32 %v262, 7
      %v264 = vsub.s32 %v261, %v263
      %v265 = vrot.slane %v257, %v264
      %v267 = vunpack.c.l.s4 1966171168
      %v268 = vunpack.c.0.s8 %v267
      %v269 = vlaneseq
      %v270 = vshrl.u32 %v269, 7
      %v271 = vsub.s32 %v268, %v270
      %v272 = vrot.slane %v258, %v271
      %v273 = vcombine.low %v265, %v272
      %v275 = vunpack.c.l.s4 1966171168
      %v276 = vunpack.c.0.s8 %v275
      %v277 = vlaneseq
      %v278 = vshrl.u32 %v277, 7
      %v279 = vsub.s32 %v276, %v278
      %v280 = vrot.slane %v273, %v279
      %v281 = vcombine.low %v204, %v210
      %v282 = vcombine.low %v216, %v222
      %v284 = vunpack.c.l.s4 1966171168
      %v285 = vunpack.c.0.s8 %v284
      %v286 = vlaneseq
      %v287 = vshrl.u32 %v286, 7
      %v288 = vsub.s32 %v285, %v287
      %v289 = vrot.slane %v281, %v288
      %v291 = vunpack.c.l.s4 1966171168
      %v292 = vunpack.c.0.s8 %v291
      %v293 = vlaneseq
      %v294 = vshrl.u32 %v293, 7
      %v295 = vsub.s32 %v292, %v294
      %v296 = vrot.slane %v282, %v295
      %v297 = vcombine.low %v289, %v296
      %v299 = vunpack.c.l.s4 1966171168
      %v300 = vunpack.c.0.s8 %v299
      %v301 = vlaneseq
      %v302 = vshrl.u32 %v301, 7
      %v303 = vsub.s32 %v300, %v302
      %v304 = vrot.slane %v297, %v303
      %vm305 = vcmask 130048
      %v307 = vsel %vm305, %v280, 0
      %v310 = vsel %vm305, %v304, 0
      %312 = vmatprep.subr.bf16.mxu0 0
      %313 = vmatpush1.bf16.xpose.msra.mxu0 %v310
      %314 = vmatprep.subr.bf16.mxu0 0
      %315 = vmatpush1.bf16.xpose.msra.mxu0 0
      %316 = vmatprep.subr.bf16.mxu0 0
      %317 = vmatpush1.bf16.xpose.msra.mxu0 0
      %318 = vmatprep.subr.bf16.mxu0 0
      %319 = vmatpush1.bf16.xpose.msra.mxu0 0
      %320 = vmatprep.subr.bf16.mxu0 0
      %321 = vmatpush1.bf16.xpose.msra.mxu0 0
      %322 = vmatprep.subr.bf16.mxu0 0
      %323 = vmatpush1.bf16.xpose.msra.mxu0 0
      %324 = vmatprep.subr.bf16.mxu0 0
      %325 = vmatpush1.bf16.xpose.msra.mxu0 0
      %326 = vmatprep.subr.bf16.mxu0 0
      %327 = vmatpush1.bf16.xpose.msra.mxu0 0
      %328 = vmatprep.subr.bf16.mxu0 0
      %329 = vmatpush1.bf16.xpose.msra.mxu0 0
      %330 = vmatprep.subr.bf16.mxu0 0
      %331 = vmatpush1.bf16.xpose.msra.mxu0 0
      %332 = vmatprep.subr.bf16.mxu0 0
      %333 = vmatpush1.bf16.xpose.msra.mxu0 0
      %334 = vmatprep.subr.bf16.mxu0 0
      %335 = vmatpush1.bf16.xpose.msra.mxu0 0
      %336 = vmatprep.subr.bf16.mxu0 0
      %337 = vmatpush1.bf16.xpose.msra.mxu0 0
      %338 = vmatprep.subr.bf16.mxu0 0
      %339 = vmatpush1.bf16.xpose.msra.mxu0 0
      %340 = vmatprep.subr.bf16.mxu0 0
      %341 = vmatpush1.bf16.xpose.msra.mxu0 0
      %342 = vmatprep.subr.bf16.mxu0 0
      %343 = vmatpush1.bf16.xpose.msra.mxu0 0
      %344 = vmatprep.mubr.bf16.mxu0 0
      %345 = vmatmul.mubr.bf16.gmra.mrb[0].mxu0 %v307
      %v346 = vpop.f32.mrb[0].mxu0
      %v347 = vadd.f32 %v255, %v346
      %v348 = vpop.f32.mrb[0].mxu0
      %v349 = vpop.f32.mrb[0].mxu0
      %v350 = vpop.f32.mrb[0].mxu0
      %351 = vdwg.mxu0
      %v352 = vcombine.low %v183, %v189
      %v353 = vcombine.low %v195, %v201
      %v355 = vunpack.c.l.s4 1966171168
      %v356 = vunpack.c.0.s8 %v355
      %v357 = vlaneseq
      %v358 = vshrl.u32 %v357, 7
      %v359 = vsub.s32 %v356, %v358
      %v360 = vrot.slane %v352, %v359
      %v362 = vunpack.c.l.s4 1966171168
      %v363 = vunpack.c.0.s8 %v362
      %v364 = vlaneseq
      %v365 = vshrl.u32 %v364, 7
      %v366 = vsub.s32 %v363, %v365
      %v367 = vrot.slane %v353, %v366
      %v368 = vcombine.low %v360, %v367
      %v370 = vunpack.c.l.s4 1966171168
      %v371 = vunpack.c.0.s8 %v370
      %v372 = vlaneseq
      %v373 = vshrl.u32 %v372, 7
      %v374 = vsub.s32 %v371, %v373
      %v375 = vrot.slane %v368, %v374
      %v376 = vcombine.low %v207, %v213
      %v377 = vcombine.low %v219, %v225
      %v379 = vunpack.c.l.s4 1966171168
      %v380 = vunpack.c.0.s8 %v379
      %v381 = vlaneseq
      %v382 = vshrl.u32 %v381, 7
      %v383 = vsub.s32 %v380, %v382
      %v384 = vrot.slane %v376, %v383
      %v386 = vunpack.c.l.s4 1966171168
      %v387 = vunpack.c.0.s8 %v386
      %v388 = vlaneseq
      %v389 = vshrl.u32 %v388, 7
      %v390 = vsub.s32 %v387, %v389
      %v391 = vrot.slane %v377, %v390
      %v392 = vcombine.low %v384, %v391
      %v394 = vunpack.c.l.s4 1966171168
      %v395 = vunpack.c.0.s8 %v394
      %v396 = vlaneseq
      %v397 = vshrl.u32 %v396, 7
      %v398 = vsub.s32 %v395, %v397
      %v399 = vrot.slane %v392, %v398
      %v401 = vsel %vm305, %v375, 0
      %v404 = vsel %vm305, %v399, 0
      %406 = vmatprep.subr.bf16.mxu0 0
      %407 = vmatpush1.bf16.xpose.msra.mxu0 %v404
      %408 = vmatprep.subr.bf16.mxu0 0
      %409 = vmatpush1.bf16.xpose.msra.mxu0 0
      %410 = vmatprep.subr.bf16.mxu0 0
      %411 = vmatpush1.bf16.xpose.msra.mxu0 0
      %412 = vmatprep.subr.bf16.mxu0 0
      %413 = vmatpush1.bf16.xpose.msra.mxu0 0
      %414 = vmatprep.subr.bf16.mxu0 0
      %415 = vmatpush1.bf16.xpose.msra.mxu0 0
      %416 = vmatprep.subr.bf16.mxu0 0
      %417 = vmatpush1.bf16.xpose.msra.mxu0 0
      %418 = vmatprep.subr.bf16.mxu0 0
      %419 = vmatpush1.bf16.xpose.msra.mxu0 0
      %420 = vmatprep.subr.bf16.mxu0 0
      %421 = vmatpush1.bf16.xpose.msra.mxu0 0
      %422 = vmatprep.subr.bf16.mxu0 0
      %423 = vmatpush1.bf16.xpose.msra.mxu0 0
      %424 = vmatprep.subr.bf16.mxu0 0
      %425 = vmatpush1.bf16.xpose.msra.mxu0 0
      %426 = vmatprep.subr.bf16.mxu0 0
      %427 = vmatpush1.bf16.xpose.msra.mxu0 0
      %428 = vmatprep.subr.bf16.mxu0 0
      %429 = vmatpush1.bf16.xpose.msra.mxu0 0
      %430 = vmatprep.subr.bf16.mxu0 0
      %431 = vmatpush1.bf16.xpose.msra.mxu0 0
      %432 = vmatprep.subr.bf16.mxu0 0
      %433 = vmatpush1.bf16.xpose.msra.mxu0 0
      %434 = vmatprep.subr.bf16.mxu0 0
      %435 = vmatpush1.bf16.xpose.msra.mxu0 0
      %436 = vmatprep.subr.bf16.mxu0 0
      %437 = vmatpush1.bf16.xpose.msra.mxu0 0
      %438 = vmatprep.mubr.bf16.mxu0 0
      %439 = vmatmul.mubr.bf16.gmra.mrb[0].mxu0 %v401
      %v440 = vpop.f32.mrb[0].mxu0
      %v441 = vadd.f32 %v255, %v440
      %v442 = vpop.f32.mrb[0].mxu0
      %v443 = vpop.f32.mrb[0].mxu0
      %v444 = vpop.f32.mrb[0].mxu0
      %445 = vdwg.mxu0
      %vm446 = vcmask 64512
      %v447 = vsel %vm446, %v347, -inf
      %448 = vmax.xlane.f32.xlu0 %v447
      %v449 = vpop.xlane.xlu0 %448
      %v450 = vsel %vm446, %v441, -inf
      %451 = vmax.xlane.f32.xlu0 %v450
      %v452 = vpop.xlane.xlu0 %451
      %v453 = vsub.f32 %v347, %v449
      %v454 = vsub.f32 %v441, %v452
      %v455 = vmul.f32 %v453, 1.442695
      %v456 = vpow.pop %v455
      %v457 = vmul.f32 %v454, 1.442695
      %v458 = vpow.pop %v457
      %v459 = vsel %vm446, %v456, 0.0
      %460 = vadd.xlane.f32.xlu0 %v459
      %v461 = vpop.xlane.xlu0 %460
      %v462 = vsel %vm446, %v458, 0.0
      %463 = vadd.xlane.f32.xlu0 %v462
      %v464 = vpop.xlane.xlu0 %463
      %v465 = vrcp.pop %v461
      %v466 = vrcp.pop %v464
      %v467 = vmul.f32 %v456, %v465
      %v468 = vmul.f32 %v458, %v466
      %v469 = vpack.c.bf16 %v467, %v467
      %v470 = vpack.c.bf16 %v468, %v468
      %v471 = vcombine.low %v228, %v234
      %v472 = vcombine.low %v240, %v246
      %v474 = vunpack.c.l.s4 1966171168
      %v475 = vunpack.c.0.s8 %v474
      %v476 = vlaneseq
      %v477 = vshrl.u32 %v476, 7
      %v478 = vsub.s32 %v475, %v477
      %v479 = vrot.slane %v471, %v478
      %v481 = vunpack.c.l.s4 1966171168
      %v482 = vunpack.c.0.s8 %v481
      %v483 = vlaneseq
      %v484 = vshrl.u32 %v483, 7
      %v485 = vsub.s32 %v482, %v484
      %v486 = vrot.slane %v472, %v485
      %v487 = vcombine.low %v479, %v486
      %v489 = vunpack.c.l.s4 1966171168
      %v490 = vunpack.c.0.s8 %v489
      %v491 = vlaneseq
      %v492 = vshrl.u32 %v491, 7
      %v493 = vsub.s32 %v490, %v492
      %v494 = vrot.slane %v487, %v493
      %v496 = vsel %vm446, %v469, 0
      %vm498 = vcmask 1043456
      %v500 = vsel %vm498, %v494, 0
      %502 = vmatprep.subr.bf16.mxu0 0
      %503 = vmatpush1.bf16.msra.mxu0 %v500
      %504 = vmatprep.subr.bf16.mxu0 0
      %505 = vmatpush1.bf16.msra.mxu0 0
      %506 = vmatprep.subr.bf16.mxu0 0
      %507 = vmatpush1.bf16.msra.mxu0 0
      %508 = vmatprep.subr.bf16.mxu0 0
      %509 = vmatpush1.bf16.msra.mxu0 0
      %510 = vmatprep.subr.bf16.mxu0 0
      %511 = vmatpush1.bf16.msra.mxu0 0
      %512 = vmatprep.subr.bf16.mxu0 0
      %513 = vmatpush1.bf16.msra.mxu0 0
      %514 = vmatprep.subr.bf16.mxu0 0
      %515 = vmatpush1.bf16.msra.mxu0 0
      %516 = vmatprep.subr.bf16.mxu0 0
      %517 = vmatpush1.bf16.msra.mxu0 0
      %518 = vmatprep.subr.bf16.mxu0 0
      %519 = vmatpush1.bf16.msra.mxu0 0
      %520 = vmatprep.subr.bf16.mxu0 0
      %521 = vmatpush1.bf16.msra.mxu0 0
      %522 = vmatprep.subr.bf16.mxu0 0
      %523 = vmatpush1.bf16.msra.mxu0 0
      %524 = vmatprep.subr.bf16.mxu0 0
      %525 = vmatpush1.bf16.msra.mxu0 0
      %526 = vmatprep.subr.bf16.mxu0 0
      %527 = vmatpush1.bf16.msra.mxu0 0
      %528 = vmatprep.subr.bf16.mxu0 0
      %529 = vmatpush1.bf16.msra.mxu0 0
      %530 = vmatprep.subr.bf16.mxu0 0
      %531 = vmatpush1.bf16.msra.mxu0 0
      %532 = vmatprep.subr.bf16.mxu0 0
      %533 = vmatpush1.bf16.msra.mxu0 0
      %534 = vmatprep.mubr.bf16.mxu0 0
      %535 = vmatmul.mubr.bf16.gmra.mrb[0].mxu0 %v496
      %v536 = vpop.f32.mrb[0].mxu0
      %v537 = vadd.f32 0.0, %v536
      %v538 = vpop.f32.mrb[0].mxu0
      %v539 = vpop.f32.mrb[0].mxu0
      %v540 = vpop.f32.mrb[0].mxu0
      %541 = vdwg.mxu0
      %v542 = vcombine.low %v231, %v237
      %v543 = vcombine.low %v243, %v249
      %v545 = vunpack.c.l.s4 1966171168
      %v546 = vunpack.c.0.s8 %v545
      %v547 = vlaneseq
      %v548 = vshrl.u32 %v547, 7
      %v549 = vsub.s32 %v546, %v548
      %v550 = vrot.slane %v542, %v549
      %v552 = vunpack.c.l.s4 1966171168
      %v553 = vunpack.c.0.s8 %v552
      %v554 = vlaneseq
      %v555 = vshrl.u32 %v554, 7
      %v556 = vsub.s32 %v553, %v555
      %v557 = vrot.slane %v543, %v556
      %v558 = vcombine.low %v550, %v557
      %v560 = vunpack.c.l.s4 1966171168
      %v561 = vunpack.c.0.s8 %v560
      %v562 = vlaneseq
      %v563 = vshrl.u32 %v562, 7
      %v564 = vsub.s32 %v561, %v563
      %v565 = vrot.slane %v558, %v564
      %v567 = vsel %vm446, %v470, 0
      %v570 = vsel %vm498, %v565, 0
      %572 = vmatprep.subr.bf16.mxu0 0
      %573 = vmatpush1.bf16.msra.mxu0 %v570
      %574 = vmatprep.subr.bf16.mxu0 0
      %575 = vmatpush1.bf16.msra.mxu0 0
      %576 = vmatprep.subr.bf16.mxu0 0
      %577 = vmatpush1.bf16.msra.mxu0 0
      %578 = vmatprep.subr.bf16.mxu0 0
      %579 = vmatpush1.bf16.msra.mxu0 0
      %580 = vmatprep.subr.bf16.mxu0 0
      %581 = vmatpush1.bf16.msra.mxu0 0
      %582 = vmatprep.subr.bf16.mxu0 0
      %583 = vmatpush1.bf16.msra.mxu0 0
      %584 = vmatprep.subr.bf16.mxu0 0
      %585 = vmatpush1.bf16.msra.mxu0 0
      %586 = vmatprep.subr.bf16.mxu0 0
      %587 = vmatpush1.bf16.msra.mxu0 0
      %588 = vmatprep.subr.bf16.mxu0 0
      %589 = vmatpush1.bf16.msra.mxu0 0
      %590 = vmatprep.subr.bf16.mxu0 0
      %591 = vmatpush1.bf16.msra.mxu0 0
      %592 = vmatprep.subr.bf16.mxu0 0
      %593 = vmatpush1.bf16.msra.mxu0 0
      %594 = vmatprep.subr.bf16.mxu0 0
      %595 = vmatpush1.bf16.msra.mxu0 0
      %596 = vmatprep.subr.bf16.mxu0 0
      %597 = vmatpush1.bf16.msra.mxu0 0
      %598 = vmatprep.subr.bf16.mxu0 0
      %599 = vmatpush1.bf16.msra.mxu0 0
      %600 = vmatprep.subr.bf16.mxu0 0
      %601 = vmatpush1.bf16.msra.mxu0 0
      %602 = vmatprep.subr.bf16.mxu0 0
      %603 = vmatpush1.bf16.msra.mxu0 0
      %604 = vmatprep.mubr.bf16.mxu0 0
      %605 = vmatmul.mubr.bf16.gmra.mrb[0].mxu0 %v567
      %v606 = vpop.f32.mrb[0].mxu0
      %v607 = vadd.f32 0.0, %v606
      %v608 = vpop.f32.mrb[0].mxu0
      %v609 = vpop.f32.mrb[0].mxu0
      %v610 = vpop.f32.mrb[0].mxu0
      %611 = vdwg.mxu0
      %v612 = vcombine.high %v537, 0.0
      %v614 = vunpack.c.l.s4 1983009808
      %v615 = vunpack.c.0.s8 %v614
      %v616 = vlaneseq
      %v617 = vshrl.u32 %v616, 7
      %v618 = vsub.s32 %v615, %v617
      %v619 = vrot.slane %v537, %v618
      %v621 = vunpack.c.l.s4 1983009808
      %v622 = vunpack.c.0.s8 %v621
      %v623 = vlaneseq
      %v624 = vshrl.u32 %v623, 7
      %v625 = vsub.s32 %v622, %v624
      %v626 = vrot.slane %v612, %v625
      %v627 = vcombine.high %v607, 0.0
      %v629 = vunpack.c.l.s4 1983009808
      %v630 = vunpack.c.0.s8 %v629
      %v631 = vlaneseq
      %v632 = vshrl.u32 %v631, 7
      %v633 = vsub.s32 %v630, %v632
      %v634 = vrot.slane %v607, %v633
      %v636 = vunpack.c.l.s4 1983009808
      %v637 = vunpack.c.0.s8 %v636
      %v638 = vlaneseq
      %v639 = vshrl.u32 %v638, 7
      %v640 = vsub.s32 %v637, %v639
      %v641 = vrot.slane %v627, %v640
      %v642 = vcombine.low %v619, %v634
      %v643 = vcombine.high %v619, %v634
      %v645 = vunpack.c.l.s4 1934713408
      %v646 = vunpack.c.0.s8 %v645
      %v647 = vlaneseq
      %v648 = vshrl.u32 %v647, 7
      %v649 = vsub.s32 %v646, %v648
      %v650 = vrot.slane %v642, %v649
      %v652 = vunpack.c.l.s4 1934713408
      %v653 = vunpack.c.0.s8 %v652
      %v654 = vlaneseq
      %v655 = vshrl.u32 %v654, 7
      %v656 = vsub.s32 %v653, %v655
      %v657 = vrot.slane %v643, %v656
      %v658 = vcombine.low %v626, %v641
      %v659 = vcombine.high %v626, %v641
      %v661 = vunpack.c.l.s4 1934713408
      %v662 = vunpack.c.0.s8 %v661
      %v663 = vlaneseq
      %v664 = vshrl.u32 %v663, 7
      %v665 = vsub.s32 %v662, %v664
      %v666 = vrot.slane %v658, %v665
      %v668 = vunpack.c.l.s4 1934713408
      %v669 = vunpack.c.0.s8 %v668
      %v670 = vlaneseq
      %v671 = vshrl.u32 %v670, 7
      %v672 = vsub.s32 %v669, %v671
      %v673 = vrot.slane %v659, %v672
      %v674 = vcombine.high %v650, 0.0
      %v675 = vcombine.high %v657, 0.0
      %v676 = vcombine.high %v666, 0.0
      %v677 = vcombine.high %v673, 0.0
      %v678 = vcombine.low %v650, %v657
      %v680 = vunpack.c.l.s4 1983009808
      %v681 = vunpack.c.0.s8 %v680
      %v682 = vlaneseq
      %v683 = vshrl.u32 %v682, 7
      %v684 = vsub.s32 %v681, %v683
      %v685 = vrot.slane %v678, %v684
      %v686 = vcombine.low %v674, %v675
      %v688 = vunpack.c.l.s4 1983009808
      %v689 = vunpack.c.0.s8 %v688
      %v690 = vlaneseq
      %v691 = vshrl.u32 %v690, 7
      %v692 = vsub.s32 %v689, %v691
      %v693 = vrot.slane %v686, %v692
      %v694 = vcombine.low %v666, %v673
      %v696 = vunpack.c.l.s4 1983009808
      %v697 = vunpack.c.0.s8 %v696
      %v698 = vlaneseq
      %v699 = vshrl.u32 %v698, 7
      %v700 = vsub.s32 %v697, %v699
      %v701 = vrot.slane %v694, %v700
      %v702 = vcombine.low %v676, %v677
      %v704 = vunpack.c.l.s4 1983009808
      %v705 = vunpack.c.0.s8 %v704
      %v706 = vlaneseq
      %v707 = vshrl.u32 %v706, 7
      %v708 = vsub.s32 %v705, %v707
      %v709 = vrot.slane %v702, %v708
      %v710 = vcombine.low %v685, %v693
      %v712 = vunpack.c.l.s4 1934713408
      %v713 = vunpack.c.0.s8 %v712
      %v714 = vlaneseq
      %v715 = vshrl.u32 %v714, 7
      %v716 = vsub.s32 %v713, %v715
      %v717 = vrot.slane %v710, %v716
      %v718 = vcombine.low %v701, %v709
      %v720 = vunpack.c.l.s4 1934713408
      %v721 = vunpack.c.0.s8 %v720
      %v722 = vlaneseq
      %v723 = vshrl.u32 %v722, 7
      %v724 = vsub.s32 %v721, %v723
      %v725 = vrot.slane %v718, %v724
      %v726 = vcombine.low %v717, %v725
      %v727 = vcombine.high %v717, %v725
      %729 = vrot.lane.b32.xlu0 %v727, 16
      %v730 = vpop.permute.xlu0 %729
      %v732 = vsel %vm305, %v726, %v730
      %v733 = vpack.c.bf16 %v732, %v732
      %vm734 = vcmask 257024
      %735 = vst.msk [vmem:[%s152] sm:$0xf] %vm734, %v733
      %p736 = scmp.lt.s32.totalorder %s13, 1
      %s737 = scalar_select %p736, %s13, 1
      %s738 = smul.addr %s737, 4
      %s739 = scalar_lea.vmem %s2, %s738
      // Predicated region
      $region29: #{superseg_forward.12} parent=27 // pred_check
        %p740 = pneg %p83
      $region30: #{superseg_forward.12} parent=27 // pred_check_branch
        %742 = sbr.rel (%p740) target = $region32
      $region31: #{superseg_forward.12} parent=27 // pred_region
        _
      $region32: #{superseg_forward.12} parent=27 // pred_fallthru
        _
    $region28: #{superseg_forward.12} parent=5 // pred_fallthru
      _
    %p743 = scmp.le.s32.totalorder 2, %s8
    // Predicated region
    $region33: #{superseg_forward.12} parent=5 // pred_check
      %p744 = pneg %p743
    $region34: #{superseg_forward.12} parent=5 // pred_check_branch
      %746 = sbr.rel (%p744) target = $region36
    $region35: #{superseg_forward.12} parent=5 // pred_region
      %s747 = ssub.s32 %s8, 2
      // Predicated region
      $region37: #{superseg_forward.12} parent=35 // pred_check
        %p748 = pneg %p89
      $region38: #{superseg_forward.12} parent=35 // pred_check_branch
        %750 = sbr.rel (%p748) target = $region40
      $region39: #{superseg_forward.12} parent=35 // pred_region
        %p751 = scmp.lt.s32.totalorder %s14, 1
        %s752 = scalar_select %p751, %s14, 1
        %s753 = smul.addr %s752, 4
        %s754 = scalar_lea.vmem %s2, %s753
      $region40: #{superseg_forward.12} parent=35 // pred_fallthru
        _
    $region36: #{superseg_forward.12} parent=5 // pred_fallthru
      _
  $region6: #{superseg_forward.12} parent=0 // loop_footer
    %s12 = sadd.s32 1, %s8
  $region7: #{superseg_forward.12} parent=0 // loop_footer_branch
    %7 = sbr.rel target = $region3
  $region8: #{superseg_forward.12} parent=0 // loop_exit
    _

// kernel: superseg_forward.14
$region0: #{superseg_forward.14}
  #allocation0 [shape = 'u32[]', space=smem, size = 0x4, offset = 0x4, fixed_abs, tag = 'smem constant byte address 0x4 - core index']
  #allocation1 [shape = 'u32[144,128]{1,0:T(1,128)}', space=vmem, size = 0x12000, scoped, tag = 'internal scratch']
  %s0 = inlined_call_operand.vmem [shape: f32[16,32], index: 0, kind: input, shape index: {}]
  %s1 = inlined_call_operand.vmem [shape: bf16[32,64], index: 1, kind: input, shape index: {}]
  %s2 = inlined_call_operand.vmem [shape: f32[1,64], index: 2, kind: input, shape index: {}]
  %s3 = inlined_call_operand.vmem [shape: bf16[64,32], index: 3, kind: input, shape index: {}]
  %s4 = inlined_call_operand.vmem [shape: f32[1,32], index: 4, kind: input, shape index: {}]
  %s5 = inlined_call_operand.vmem [shape: f32[1,32], index: 5, kind: input, shape index: {}]
  %s6 = inlined_call_operand.vmem [shape: f32[1,32], index: 6, kind: input, shape index: {}]
  %s7 = inlined_call_operand.vmem [shape: f32[16,32], index: 7, kind: output, shape index: {}]
  %s8 = sld [smem:[#allocation0]]
  $region38: #{superseg_forward.14} parent=0
    _
  %s10 = ssub.s32 1, %s8
  %s11 = scalar_select 0, %s10, %s8
  // Predicated region
  $region2: #{superseg_forward.14} parent=0 // pred_check
    _
  $region3: #{superseg_forward.14} parent=0 // pred_check_branch
    %13 = sbr.rel (0) target = $region5
  $region4: #{superseg_forward.14} parent=0 // pred_region
    _
  $region5: #{superseg_forward.14} parent=0 // pred_fallthru
    _
  // Predicated region
  $region6: #{superseg_forward.14} parent=0 // pred_check
    _
  $region7: #{superseg_forward.14} parent=0 // pred_check_branch
    %15 = sbr.rel (0) target = $region9
  $region8: #{superseg_forward.14} parent=0 // pred_region
    _
  $region9: #{superseg_forward.14} parent=0 // pred_fallthru
    _
  // Predicated region
  $region10: #{superseg_forward.14} parent=0 // pred_check
    _
  $region11: #{superseg_forward.14} parent=0 // pred_check_branch
    %17 = sbr.rel (0) target = $region13
  $region12: #{superseg_forward.14} parent=0 // pred_region
    _
  $region13: #{superseg_forward.14} parent=0 // pred_fallthru
    _
  // Predicated region
  $region14: #{superseg_forward.14} parent=0 // pred_check
    _
  $region15: #{superseg_forward.14} parent=0 // pred_check_branch
    %19 = sbr.rel (0) target = $region17
  $region16: #{superseg_forward.14} parent=0 // pred_region
    _
  $region17: #{superseg_forward.14} parent=0 // pred_fallthru
    _
  // Predicated region
  $region18: #{superseg_forward.14} parent=0 // pred_check
    _
  $region19: #{superseg_forward.14} parent=0 // pred_check_branch
    %21 = sbr.rel (0) target = $region21
  $region20: #{superseg_forward.14} parent=0 // pred_region
    _
  $region21: #{superseg_forward.14} parent=0 // pred_fallthru
    _
  // Predicated region
  $region22: #{superseg_forward.14} parent=0 // pred_check
    _
  $region23: #{superseg_forward.14} parent=0 // pred_check_branch
    %23 = sbr.rel (0) target = $region25
  $region24: #{superseg_forward.14} parent=0 // pred_region
    _
  $region25: #{superseg_forward.14} parent=0 // pred_fallthru
    _
  // Predicated region
  $region26: #{superseg_forward.14} parent=0 // pred_check
    _
  $region27: #{superseg_forward.14} parent=0 // pred_check_branch
    %25 = sbr.rel (0) target = $region29
  $region28: #{superseg_forward.14} parent=0 // pred_region
    _
  $region29: #{superseg_forward.14} parent=0 // pred_fallthru
    _
  %v27 = vld [vmem:[%s0] sm:$0xff]
  %v28 = vld [vmem:[%s0 + $0x8] sm:$0xff]
  %v29 = vpack.c.bf16 %v28, %v27
  %v30 = vld [vmem:[%s1] sm:$0xf]
  %v31 = vld [vmem:[%s1 + $0x4] sm:$0xf]
  %v32 = vld [vmem:[%s1 + $0x8] sm:$0xf]
  %v33 = vld [vmem:[%s1 + $0xc] sm:$0xf]
  %v34 = vld [vmem:[%s2] sm:$0x1]
  %v36 = vlaneseq
  %v37 = vshrl.u32 %v36, 7
  %v38 = vsub.s32 0, %v37
  %v39 = vrot.slane %v34, %v38
  %v45 = vunpack.c.l.b16 %v30
  %v46 = vunpack.c.l.b16 %v31
  %v47 = vunpack.c.l.b16 %v32
  %v48 = vunpack.c.l.b16 %v33
  %v49 = vpack.c.b16 %v46, %v45
  %v50 = vpack.c.b16 %v48, %v47
  %vm53 = vcmask 261120
  %v55 = vsel %vm53, %v29, 0
  %57 = vmatprep.subr.bf16.mxu0 0
  %58 = vmatpush1.bf16.msra.mxu0 %v49
  %59 = vmatprep.subr.bf16.mxu0 0
  %60 = vmatpush1.bf16.msra.mxu0 %v50
  %61 = vmatprep.subr.bf16.mxu0 0
  %62 = vmatpush1.bf16.msra.mxu0 0
  %63 = vmatprep.subr.bf16.mxu0 0
  %64 = vmatpush1.bf16.msra.mxu0 0
  %65 = vmatprep.subr.bf16.mxu0 0
  %66 = vmatpush1.bf16.msra.mxu0 0
  %67 = vmatprep.subr.bf16.mxu0 0
  %68 = vmatpush1.bf16.msra.mxu0 0
  %69 = vmatprep.subr.bf16.mxu0 0
  %70 = vmatpush1.bf16.msra.mxu0 0
  %71 = vmatprep.subr.bf16.mxu0 0
  %72 = vmatpush1.bf16.msra.mxu0 0
  %73 = vmatprep.subr.bf16.mxu0 0
  %74 = vmatpush1.bf16.msra.mxu0 0
  %75 = vmatprep.subr.bf16.mxu0 0
  %76 = vmatpush1.bf16.msra.mxu0 0
  %77 = vmatprep.subr.bf16.mxu0 0
  %78 = vmatpush1.bf16.msra.mxu0 0
  %79 = vmatprep.subr.bf16.mxu0 0
  %80 = vmatpush1.bf16.msra.mxu0 0
  %81 = vmatprep.subr.bf16.mxu0 0
  %82 = vmatpush1.bf16.msra.mxu0 0
  %83 = vmatprep.subr.bf16.mxu0 0
  %84 = vmatpush1.bf16.msra.mxu0 0
  %85 = vmatprep.subr.bf16.mxu0 0
  %86 = vmatpush1.bf16.msra.mxu0 0
  %87 = vmatprep.subr.bf16.mxu0 0
  %88 = vmatpush1.bf16.msra.mxu0 0
  %89 = vmatprep.mubr.bf16.mxu0 0
  %90 = vmatmul.mubr.bf16.gmra.mrb[0].mxu0 %v55
  %v91 = vpop.f32.mrb[0].mxu0
  %v92 = vadd.f32 %v39, %v91
  %v93 = vpop.f32.mrb[0].mxu0
  %v94 = vpop.f32.mrb[0].mxu0
  %v95 = vadd.f32 %v39, %v94
  %v96 = vpop.f32.mrb[0].mxu0
  %97 = vdwg.mxu0
  %v98 = vmul.f32 %v92, 0.5
  %v99 = vmul.f32 %v95, 0.5
  %v100 = vrcp.pop 1.4142135
  %v101 = vmul.f32 %v92, %v100
  %v102 = vmul.f32 %v95, %v100
  %v103 = verf.f32.pop %v101
  %v104 = verf.f32.pop %v102
  %v105 = vadd.f32 %v103, 1.0
  %v106 = vadd.f32 %v104, 1.0
  %v107 = vmul.f32 %v98, %v105
  %v108 = vmul.f32 %v99, %v106
  %v109 = vpack.c.bf16 %v108, %v107
  %v110 = vld [vmem:[%s3] sm:$0xf]
  %v111 = vld [vmem:[%s3 + $0x4] sm:$0xf]
  %v112 = vld [vmem:[%s3 + $0x8] sm:$0xf]
  %v113 = vld [vmem:[%s3 + $0xc] sm:$0xf]
  %v114 = vld [vmem:[%s3 + $0x10] sm:$0xf]
  %v115 = vld [vmem:[%s3 + $0x14] sm:$0xf]
  %v116 = vld [vmem:[%s3 + $0x18] sm:$0xf]
  %v117 = vld [vmem:[%s3 + $0x1c] sm:$0xf]
  %v118 = vld [vmem:[%s4] sm:$0x1]
  %v120 = vlaneseq
  %v121 = vshrl.u32 %v120, 7
  %v122 = vsub.s32 0, %v121
  %v123 = vrot.slane %v118, %v122
  %v133 = vunpack.c.l.b16 %v110
  %v134 = vunpack.c.l.b16 %v111
  %v135 = vunpack.c.l.b16 %v112
  %v136 = vunpack.c.l.b16 %v113
  %v137 = vunpack.c.l.b16 %v114
  %v138 = vunpack.c.l.b16 %v115
  %v139 = vunpack.c.l.b16 %v116
  %v140 = vunpack.c.l.b16 %v117
  %v141 = vpack.c.b16 %v134, %v133
  %v142 = vpack.c.b16 %v136, %v135
  %v143 = vpack.c.b16 %v138, %v137
  %v144 = vpack.c.b16 %v140, %v139
  %vm149 = vcmask 523264
  %v151 = vsel %vm149, %v109, 0
  %153 = vmatprep.subr.bf16.mxu0 0
  %154 = vmatpush1.bf16.msra.mxu0 %v141
  %155 = vmatprep.subr.bf16.mxu0 0
  %156 = vmatpush1.bf16.msra.mxu0 %v142
  %157 = vmatprep.subr.bf16.mxu0 0
  %158 = vmatpush1.bf16.msra.mxu0 %v143
  %159 = vmatprep.subr.bf16.mxu0 0
  %160 = vmatpush1.bf16.msra.mxu0 %v144
  %161 = vmatprep.subr.bf16.mxu0 0
  %162 = vmatpush1.bf16.msra.mxu0 0
  %163 = vmatprep.subr.bf16.mxu0 0
  %164 = vmatpush1.bf16.msra.mxu0 0
  %165 = vmatprep.subr.bf16.mxu0 0
  %166 = vmatpush1.bf16.msra.mxu0 0
  %167 = vmatprep.subr.bf16.mxu0 0
  %168 = vmatpush1.bf16.msra.mxu0 0
  %169 = vmatprep.subr.bf16.mxu0 0
  %170 = vmatpush1.bf16.msra.mxu0 0
  %171 = vmatprep.subr.bf16.mxu0 0
  %172 = vmatpush1.bf16.msra.mxu0 0
  %173 = vmatprep.subr.bf16.mxu0 0
  %174 = vmatpush1.bf16.msra.mxu0 0
  %175 = vmatprep.subr.bf16.mxu0 0
  %176 = vmatpush1.bf16.msra.mxu0 0
  %177 = vmatprep.subr.bf16.mxu0 0
  %178 = vmatpush1.bf16.msra.mxu0 0
  %179 = vmatprep.subr.bf16.mxu0 0
  %180 = vmatpush1.bf16.msra.mxu0 0
  %181 = vmatprep.subr.bf16.mxu0 0
  %182 = vmatpush1.bf16.msra.mxu0 0
  %183 = vmatprep.subr.bf16.mxu0 0
  %184 = vmatpush1.bf16.msra.mxu0 0
  %185 = vmatprep.mubr.bf16.mxu0 0
  %186 = vmatmul.mubr.bf16.gmra.mrb[0].mxu0 %v151
  %v187 = vpop.f32.mrb[0].mxu0
  %v188 = vadd.f32 %v123, %v187
  %v189 = vpop.f32.mrb[0].mxu0
  %v190 = vpop.f32.mrb[0].mxu0
  %v191 = vadd.f32 %v123, %v190
  %v192 = vpop.f32.mrb[0].mxu0
  %193 = vdwg.mxu0
  %v194 = vadd.f32 %v188, %v27
  %v195 = vadd.f32 %v191, %v28
  %v196 = vld [vmem:[%s5] sm:$0x1]
  %v197 = vld [vmem:[%s6] sm:$0x1]
  %v198 = vsel %vm53, %v194, 0.0
  %199 = vadd.xlane.f32.xlu0 %v198
  %v200 = vpop.xlane.xlu0 %199
  %v201 = vsel %vm53, %v195, 0.0
  %202 = vadd.xlane.f32.xlu0 %v201
  %v203 = vpop.xlane.xlu0 %202
  %v204 = vrcp.pop 32.0
  %v205 = vmul.f32 %v200, %v204
  %v206 = vmul.f32 %v203, %v204
  %v207 = vsub.f32 %v194, %v205
  %v208 = vsub.f32 %v195, %v206
  %v209 = vmul.f32 %v207, %v207
  %v210 = vmul.f32 %v208, %v208
  %v211 = vsel %vm53, %v209, 0.0
  %212 = vadd.xlane.f32.xlu0 %v211
  %v213 = vpop.xlane.xlu0 %212
  %v214 = vsel %vm53, %v210, 0.0
  %215 = vadd.xlane.f32.xlu0 %v214
  %v216 = vpop.xlane.xlu0 %215
  %v217 = vmul.f32 %v213, %v204
  %v218 = vmul.f32 %v216, %v204
  %v219 = vadd.f32 %v217, 1e-05
  %v220 = vadd.f32 %v218, 1e-05
  %v221 = vrsqrt.pop %v219
  %v222 = vrsqrt.pop %v220
  %v223 = vmul.f32 %v207, %v221
  %v224 = vmul.f32 %v208, %v222
  %v226 = vlaneseq
  %v227 = vshrl.u32 %v226, 7
  %v228 = vsub.s32 0, %v227
  %v229 = vrot.slane %v196, %v228
  %v231 = vmul.f32 %v223, %v229
  %v232 = vmul.f32 %v224, %v229
  %v234 = vlaneseq
  %v235 = vshrl.u32 %v234, 7
  %v236 = vsub.s32 0, %v235
  %v237 = vrot.slane %v197, %v236
  %v239 = vadd.f32 %v231, %v237
  %v240 = vadd.f32 %v232, %v237
  %241 = vst.msk [vmem:[%s7] sm:$0xff] %vm53, %v239
  %242 = vst.msk [vmem:[%s7 + $0x8] sm:$0xff] %vm53, %v240
  // Predicated region
  $region30: #{superseg_forward.14} parent=0 // pred_check
    _
  $region31: #{superseg_forward.14} parent=0 // pred_check_branch
    %244 = sbr.rel (0) target = $region33
  $region32: #{superseg_forward.14} parent=0 // pred_region
    _
  $region33: #{superseg_forward.14} parent=0 // pred_fallthru
    _
  // Predicated region
  $region34: #{superseg_forward.14} parent=0 // pred_check
    _
  $region35: #{superseg_forward.14} parent=0 // pred_check_branch
    %246 = sbr.rel (0) target = $region37
  $region36: #{superseg_forward.14} parent=0 // pred_region
    _
  $region37: #{superseg_forward.14} parent=0 // pred_fallthru
    _

// kernel: superseg_forward.19
$region0: #{superseg_forward.19}
  #allocation0 [shape = 'u32[]', space=smem, size = 0x4, offset = 0x4, fixed_abs, tag = 'smem constant byte address 0x4 - core index']
  #allocation1 [shape = 'u32[144,128]{1,0:T(1,128)}', space=vmem, size = 0x12000, scoped, tag = 'internal scratch']
  %s0 = inlined_call_operand.vmem [shape: f32[16,32], index: 0, kind: input, shape index: {}]
  %s1 = inlined_call_operand.vmem [shape: bf16[32,32], index: 1, kind: input, shape index: {}]
  %s2 = inlined_call_operand.vmem [shape: f32[1,32], index: 2, kind: input, shape index: {}]
  %s3 = inlined_call_operand.vmem [shape: f32[1,32], index: 3, kind: input, shape index: {}]
  %s4 = inlined_call_operand.vmem [shape: f32[1,32], index: 4, kind: input, shape index: {}]
  %s5 = inlined_call_operand.vmem [shape: bf16[32,128], index: 5, kind: input, shape index: {}]
  %s6 = inlined_call_operand.vmem [shape: f32[1,128], index: 6, kind: input, shape index: {}]
  %s7 = inlined_call_operand.vmem [shape: f32[16,128], index: 7, kind: output, shape index: {}]
  %s8 = sld [smem:[#allocation0]]
  $region38: #{superseg_forward.19} parent=0
    _
  %s10 = ssub.s32 1, %s8
  %s11 = scalar_select 0, %s10, %s8
  // Predicated region
  $region2: #{superseg_forward.19} parent=0 // pred_check
    _
  $region3: #{superseg_forward.19} parent=0 // pred_check_branch
    %13 = sbr.rel (0) target = $region5
  $region4: #{superseg_forward.19} parent=0 // pred_region
    _
  $region5: #{superseg_forward.19} parent=0 // pred_fallthru
    _
  // Predicated region
  $region6: #{superseg_forward.19} parent=0 // pred_check
    _
  $region7: #{superseg_forward.19} parent=0 // pred_check_branch
    %15 = sbr.rel (0) target = $region9
  $region8: #{superseg_forward.19} parent=0 // pred_region
    _
  $region9: #{superseg_forward.19} parent=0 // pred_fallthru
    _
  // Predicated region
  $region10: #{superseg_forward.19} parent=0 // pred_check
    _
  $region11: #{superseg_forward.19} parent=0 // pred_check_branch
    %17 = sbr.rel (0) target = $region13
  $region12: #{superseg_forward.19} parent=0 // pred_region
    _
  $region13: #{superseg_forward.19} parent=0 // pred_fallthru
    _
  // Predicated region
  $region14: #{superseg_forward.19} parent=0 // pred_check
    _
  $region15: #{superseg_forward.19} parent=0 // pred_check_branch
    %19 = sbr.rel (0) target = $region17
  $region16: #{superseg_forward.19} parent=0 // pred_region
    _
  $region17: #{superseg_forward.19} parent=0 // pred_fallthru
    _
  // Predicated region
  $region18: #{superseg_forward.19} parent=0 // pred_check
    _
  $region19: #{superseg_forward.19} parent=0 // pred_check_branch
    %21 = sbr.rel (0) target = $region21
  $region20: #{superseg_forward.19} parent=0 // pred_region
    _
  $region21: #{superseg_forward.19} parent=0 // pred_fallthru
    _
  // Predicated region
  $region22: #{superseg_forward.19} parent=0 // pred_check
    _
  $region23: #{superseg_forward.19} parent=0 // pred_check_branch
    %23 = sbr.rel (0) target = $region25
  $region24: #{superseg_forward.19} parent=0 // pred_region
    _
  $region25: #{superseg_forward.19} parent=0 // pred_fallthru
    _
  // Predicated region
  $region26: #{superseg_forward.19} parent=0 // pred_check
    _
  $region27: #{superseg_forward.19} parent=0 // pred_check_branch
    %25 = sbr.rel (0) target = $region29
  $region28: #{superseg_forward.19} parent=0 // pred_region
    _
  $region29: #{superseg_forward.19} parent=0 // pred_fallthru
    _
  %v27 = vld [vmem:[%s0] sm:$0xff]
  %v28 = vld [vmem:[%s0 + $0x8] sm:$0xff]
  %v29 = vpack.c.bf16 %v28, %v27
  %v30 = vld [vmem:[%s1] sm:$0xf]
  %v31 = vld [vmem:[%s1 + $0x4] sm:$0xf]
  %v32 = vld [vmem:[%s1 + $0x8] sm:$0xf]
  %v33 = vld [vmem:[%s1 + $0xc] sm:$0xf]
  %v34 = vld [vmem:[%s2] sm:$0x1]
  %v36 = vlaneseq
  %v37 = vshrl.u32 %v36, 7
  %v38 = vsub.s32 0, %v37
  %v39 = vrot.slane %v34, %v38
  %v45 = vunpack.c.l.b16 %v30
  %v46 = vunpack.c.l.b16 %v31
  %v47 = vunpack.c.l.b16 %v32
  %v48 = vunpack.c.l.b16 %v33
  %v49 = vpack.c.b16 %v46, %v45
  %v50 = vpack.c.b16 %v48, %v47
  %vm53 = vcmask 261120
  %v55 = vsel %vm53, %v29, 0
  %57 = vmatprep.subr.bf16.mxu0 0
  %58 = vmatpush1.bf16.msra.mxu0 %v49
  %59 = vmatprep.subr.bf16.mxu0 0
  %60 = vmatpush1.bf16.msra.mxu0 %v50
  %61 = vmatprep.subr.bf16.mxu0 0
  %62 = vmatpush1.bf16.msra.mxu0 0
  %63 = vmatprep.subr.bf16.mxu0 0
  %64 = vmatpush1.bf16.msra.mxu0 0
  %65 = vmatprep.subr.bf16.mxu0 0
  %66 = vmatpush1.bf16.msra.mxu0 0
  %67 = vmatprep.subr.bf16.mxu0 0
  %68 = vmatpush1.bf16.msra.mxu0 0
  %69 = vmatprep.subr.bf16.mxu0 0
  %70 = vmatpush1.bf16.msra.mxu0 0
  %71 = vmatprep.subr.bf16.mxu0 0
  %72 = vmatpush1.bf16.msra.mxu0 0
  %73 = vmatprep.subr.bf16.mxu0 0
  %74 = vmatpush1.bf16.msra.mxu0 0
  %75 = vmatprep.subr.bf16.mxu0 0
  %76 = vmatpush1.bf16.msra.mxu0 0
  %77 = vmatprep.subr.bf16.mxu0 0
  %78 = vmatpush1.bf16.msra.mxu0 0
  %79 = vmatprep.subr.bf16.mxu0 0
  %80 = vmatpush1.bf16.msra.mxu0 0
  %81 = vmatprep.subr.bf16.mxu0 0
  %82 = vmatpush1.bf16.msra.mxu0 0
  %83 = vmatprep.subr.bf16.mxu0 0
  %84 = vmatpush1.bf16.msra.mxu0 0
  %85 = vmatprep.subr.bf16.mxu0 0
  %86 = vmatpush1.bf16.msra.mxu0 0
  %87 = vmatprep.subr.bf16.mxu0 0
  %88 = vmatpush1.bf16.msra.mxu0 0
  %89 = vmatprep.mubr.bf16.mxu0 0
  %90 = vmatmul.mubr.bf16.gmra.mrb[0].mxu0 %v55
  %v91 = vpop.f32.mrb[0].mxu0
  %v92 = vadd.f32 %v39, %v91
  %v93 = vpop.f32.mrb[0].mxu0
  %v94 = vpop.f32.mrb[0].mxu0
  %v95 = vadd.f32 %v39, %v94
  %v96 = vpop.f32.mrb[0].mxu0
  %97 = vdwg.mxu0
  %v98 = vmul.f32 %v92, 0.5
  %v99 = vmul.f32 %v95, 0.5
  %v100 = vrcp.pop 1.4142135
  %v101 = vmul.f32 %v92, %v100
  %v102 = vmul.f32 %v95, %v100
  %v103 = verf.f32.pop %v101
  %v104 = verf.f32.pop %v102
  %v105 = vadd.f32 %v103, 1.0
  %v106 = vadd.f32 %v104, 1.0
  %v107 = vmul.f32 %v98, %v105
  %v108 = vmul.f32 %v99, %v106
  %v109 = vld [vmem:[%s3] sm:$0x1]
  %v110 = vld [vmem:[%s4] sm:$0x1]
  %v111 = vsel %vm53, %v107, 0.0
  %112 = vadd.xlane.f32.xlu0 %v111
  %v113 = vpop.xlane.xlu0 %112
  %v114 = vsel %vm53, %v108, 0.0
  %115 = vadd.xlane.f32.xlu0 %v114
  %v116 = vpop.xlane.xlu0 %115
  %v117 = vrcp.pop 32.0
  %v118 = vmul.f32 %v113, %v117
  %v119 = vmul.f32 %v116, %v117
  %v120 = vsub.f32 %v107, %v118
  %v121 = vsub.f32 %v108, %v119
  %v122 = vmul.f32 %v120, %v120
  %v123 = vmul.f32 %v121, %v121
  %v124 = vsel %vm53, %v122, 0.0
  %125 = vadd.xlane.f32.xlu0 %v124
  %v126 = vpop.xlane.xlu0 %125
  %v127 = vsel %vm53, %v123, 0.0
  %128 = vadd.xlane.f32.xlu0 %v127
  %v129 = vpop.xlane.xlu0 %128
  %v130 = vmul.f32 %v126, %v117
  %v131 = vmul.f32 %v129, %v117
  %v132 = vadd.f32 %v130, 1e-05
  %v133 = vadd.f32 %v131, 1e-05
  %v134 = vrsqrt.pop %v132
  %v135 = vrsqrt.pop %v133
  %v136 = vmul.f32 %v120, %v134
  %v137 = vmul.f32 %v121, %v135
  %v139 = vlaneseq
  %v140 = vshrl.u32 %v139, 7
  %v141 = vsub.s32 0, %v140
  %v142 = vrot.slane %v109, %v141
  %v144 = vmul.f32 %v136, %v142
  %v145 = vmul.f32 %v137, %v142
  %v147 = vlaneseq
  %v148 = vshrl.u32 %v147, 7
  %v149 = vsub.s32 0, %v148
  %v150 = vrot.slane %v110, %v149
  %v152 = vadd.f32 %v144, %v150
  %v153 = vadd.f32 %v145, %v150
  %v154 = vpack.c.bf16 %v153, %v152
  %v155 = vld [vmem:[%s5] sm:$0xf]
  %v156 = vld [vmem:[%s5 + $0x4] sm:$0xf]
  %v157 = vld [vmem:[%s5 + $0x8] sm:$0xf]
  %v158 = vld [vmem:[%s5 + $0xc] sm:$0xf]
  %v159 = vld [vmem:[%s6] sm:$0x1]
  %v161 = vlaneseq
  %v162 = vshrl.u32 %v161, 7
  %v163 = vsub.s32 0, %v162
  %v164 = vrot.slane %v159, %v163
  %v170 = vunpack.c.l.b16 %v155
  %v171 = vunpack.c.l.b16 %v156
  %v172 = vunpack.c.l.b16 %v157
  %v173 = vunpack.c.l.b16 %v158
  %v174 = vpack.c.b16 %v171, %v170
  %v175 = vpack.c.b16 %v173, %v172
  %v179 = vsel %vm53, %v154, 0
  %181 = vmatprep.subr.bf16.mxu0 0
  %182 = vmatpush1.bf16.msra.mxu0 %v174
  %183 = vmatprep.subr.bf16.mxu0 0
  %184 = vmatpush1.bf16.msra.mxu0 %v175
  %185 = vmatprep.subr.bf16.mxu0 0
  %186 = vmatpush1.bf16.msra.mxu0 0
  %187 = vmatprep.subr.bf16.mxu0 0
  %188 = vmatpush1.bf16.msra.mxu0 0
  %189 = vmatprep.subr.bf16.mxu0 0
  %190 = vmatpush1.bf16.msra.mxu0 0
  %191 = vmatprep.subr.bf16.mxu0 0
  %192 = vmatpush1.bf16.msra.mxu0 0
  %193 = vmatprep.subr.bf16.mxu0 0
  %194 = vmatpush1.bf16.msra.mxu0 0
  %195 = vmatprep.subr.bf16.mxu0 0
  %196 = vmatpush1.bf16.msra.mxu0 0
  %197 = vmatprep.subr.bf16.mxu0 0
  %198 = vmatpush1.bf16.msra.mxu0 0
  %199 = vmatprep.subr.bf16.mxu0 0
  %200 = vmatpush1.bf16.msra.mxu0 0
  %201 = vmatprep.subr.bf16.mxu0 0
  %202 = vmatpush1.bf16.msra.mxu0 0
  %203 = vmatprep.subr.bf16.mxu0 0
  %204 = vmatpush1.bf16.msra.mxu0 0
  %205 = vmatprep.subr.bf16.mxu0 0
  %206 = vmatpush1.bf16.msra.mxu0 0
  %207 = vmatprep.subr.bf16.mxu0 0
  %208 = vmatpush1.bf16.msra.mxu0 0
  %209 = vmatprep.subr.bf16.mxu0 0
  %210 = vmatpush1.bf16.msra.mxu0 0
  %211 = vmatprep.subr.bf16.mxu0 0
  %212 = vmatpush1.bf16.msra.mxu0 0
  %213 = vmatprep.mubr.bf16.mxu0 0
  %214 = vmatmul.mubr.bf16.gmra.mrb[0].mxu0 %v179
  %v215 = vpop.f32.mrb[0].mxu0
  %v216 = vadd.f32 %v164, %v215
  %v217 = vpop.f32.mrb[0].mxu0
  %v218 = vpop.f32.mrb[0].mxu0
  %v219 = vadd.f32 %v164, %v218
  %v220 = vpop.f32.mrb[0].mxu0
  %221 = vdwg.mxu0
  %222 = vst [vmem:[%s7] sm:$0xff] %v216
  %223 = vst [vmem:[%s7 + $0x8] sm:$0xff] %v219
  // Predicated region
  $region30: #{superseg_forward.19} parent=0 // pred_check
    _
  $region31: #{superseg_forward.19} parent=0 // pred_check_branch
    %225 = sbr.rel (0) target = $region33
  $region32: #{superseg_forward.19} parent=0 // pred_region
    _
  $region33: #{superseg_forward.19} parent=0 // pred_fallthru
    _
  // Predicated region
  $region34: #{superseg_forward.19} parent=0 // pred_check
    _
  $region35: #{superseg_forward.19} parent=0 // pred_check_branch
    %227 = sbr.rel (0) target = $region37
  $region36: #{superseg_forward.19} parent=0 // pred_region
    _
  $region37: #{superseg_forward.19} parent=0 // pred_fallthru
    _

</llo_original>
